<compile_context>
chip_gen: v7x
topology: tpu7x:2x2x1
jax: 0.10.0
libtpu: 0.0.40
codegen_flags: <defaults>
</compile_context>

<pallas_src>
import functools

import jax
import jax.numpy as jnp
from jax import lax
from jax.experimental import pallas as pl
from jax.experimental.pallas import tpu as pltpu

HIDDEN = 128              # hidden_size (Linear(2*hidden, 512) => hidden = 128)
OBS_FEATS = 8 * 2 * 2     # 32
ACT_FEATS = OBS_FEATS + 3 # [obs(32) | params | meas | scale]


def _leaky(x):
    # LeakyReLU(0.2): one mul + one max (no compare/select).
    return jnp.maximum(x, 0.2 * x)


def _round_up(x, m):
    return (x + m - 1) // m * m


# -----------------------------------------------------------------------------
# Kernel
# -----------------------------------------------------------------------------
def discriminator_kernel(
    # activations (tiled over batch): (TB, 35) f32 = [obs(32) | par | meas | scale]
    act_ref,
    # backbone layer 1 (obs + param embeds folded in)
    w1_f, b1_all,
    # backbone layer 2
    wb2, bb2,
    # backbone layer 3 fused into head layer 1 x-slice (+ folded meas/scale embeds)
    wb3d1, w_meas_f, w_scale_f, bd1_all,
    # head layer 2
    wd2, bd2,
    # head layer 3 (Linear(128,1)) as a lane-dense transposed matmul
    wd3_row, bd3,
    # output: (1, 1, TB) lane-dense row
    out_ref,
):
    f32 = jnp.float32
    cdt = w1_f.dtype  # matmul operand dtype (bf16 in the optimized path)

    act = act_ref[...]                        # (TB, 35) f32
    obs_par = act[:, :OBS_FEATS + 1].astype(cdt)   # obs(32) + params(1) -> matmul LHS
    meas = act[:, OBS_FEATS + 1:OBS_FEATS + 2]     # (TB, 1) f32
    scl = act[:, OBS_FEATS + 2:OBS_FEATS + 3]      # (TB, 1) f32

    # --- backbone ------------------------------------------------------------
    # layer 1: obs & param embeddings pre-folded into w1_f / b1_all (exact fold)
    x = jnp.dot(obs_par, w1_f[...], preferred_element_type=f32) + b1_all[...]
    x = _leaky(x)                                                       # (TB, 512)
    # layer 2
    x = _leaky(jnp.dot(x.astype(cdt), wb2[...], preferred_element_type=f32) + bb2[...])

    # --- backbone layer 3 fused with discriminator head layer 1 ---------------
    # y = (x @ wb3 + bb3) @ wd1_x + meas_ebd @ wd1_meas + scale_ebd @ wd1_scale + bd1
    y = jnp.dot(x.astype(cdt), wb3d1[...], preferred_element_type=f32)
    y = _leaky(y + meas * w_meas_f[...] + scl * w_scale_f[...] + bd1_all[...])  # (TB, 256)
    # head layer 2
    y = _leaky(jnp.dot(y.astype(cdt), wd2[...], preferred_element_type=f32) + bd2[...])  # (TB, 128)

    # head layer 3 Linear(128, 1): (1,128) x (TB,128)^T -> (1, TB) lane-dense row
    logits = lax.dot_general(
        wd3_row[...], y.astype(cdt),
        dimension_numbers=(((1,), (1,)), ((), ())),
        preferred_element_type=f32,
    )                                                                   # (1, TB)
    out_ref[0] = logits + bd3[...]                                      # store (1, TB)


# -----------------------------------------------------------------------------
# Parameter prep (done once, outside the per-call path)
# -----------------------------------------------------------------------------
def init_params(key, hidden=HIDDEN):
    """Deterministic synthetic parameters (same shapes as the nn.Module)."""
    ks = list(jax.random.split(key, 20))
    k = iter(ks)

    def lin(in_f, out_f):
        # weight stored as [in, out] so we do x @ W (PyTorch stores [out, in])
        w = jax.random.normal(next(k), (in_f, out_f), jnp.float32) * (1.0 / jnp.sqrt(in_f))
        b = jax.random.normal(next(k), (1, out_f), jnp.float32) * 0.01
        return w, b

    p = {}
    p["obs"] = lin(OBS_FEATS, hidden)
    p["meas"] = lin(1, hidden)
    p["param"] = lin(1, hidden)
    p["scale"] = lin(1, hidden)
    p["bb1"] = lin(2 * hidden, 512)
    p["bb2"] = lin(512, 512)
    p["bb3"] = lin(512, 256)
    p["d1"] = lin(512, 256)
    p["d2"] = lin(256, 128)
    p["d3"] = lin(128, 1)
    return p


def prepare_params(p, compute_dtype=jnp.bfloat16, hidden=HIDDEN):
    """Pre-slice wb1/wd1, apply the exact algebraic folds, cast matmul weights.

    Returns the flat tuple of arrays in the exact order the kernel expects.
    Call once per parameter set (not per forward call).
    """
    f32 = jnp.float32
    H = hidden
    mm = functools.partial(jnp.dot, precision="highest")   # exact one-time folds

    w_obs, b_obs = p["obs"]
    w_meas, b_meas = p["meas"]
    w_par, b_par = p["param"]
    w_scale, b_scale = p["scale"]
    wb1, bb1 = p["bb1"]
    wb2, bb2 = p["bb2"]
    wb3, bb3 = p["bb3"]
    wd1, bd1 = p["d1"]
    wd2, bd2 = p["d2"]
    wd3, bd3 = p["d3"]

    # split wb1 / wd1 according to the concat order of the reference forward()
    wb1_par, wb1_obs = wb1[:H], wb1[H:]                       # cat((param_ebd, obs_ebd), 1)
    wd1_x, wd1_meas, wd1_scale = wd1[:2 * H], wd1[2 * H:3 * H], wd1[3 * H:]

    # Fold 1: obs & param embeddings into backbone layer 1 (no nonlinearity between).
    #   [obs | par] @ w1_f + b1_all  ==  cat(param_ebd, obs_ebd) @ wb1 + bb1
    w1_f = jnp.concatenate([mm(w_obs, wb1_obs), mm(w_par, wb1_par)], axis=0)  # (33, 512)
    b1_all = mm(b_obs, wb1_obs) + mm(b_par, wb1_par) + bb1                    # (1, 512)

    # Fold 2: backbone layer 3 (no activation after it) into d1's x-slice.
    wb3d1 = mm(wb3, wd1_x)                                                    # (512, 256)
    bd1_all = mm(bb3, wd1_x) + mm(b_meas, wd1_meas) + mm(b_scale, wd1_scale) + bd1

    return (
        w1_f.astype(compute_dtype), b1_all.astype(f32),       # backbone L1
        wb2.astype(compute_dtype), bb2.astype(f32),            # backbone L2
        wb3d1.astype(compute_dtype),                           # backbone L3 ⊗ head L1
        mm(w_meas, wd1_meas).astype(f32),                      # (1, 256) folded meas embed
        mm(w_scale, wd1_scale).astype(f32),                    # (1, 256) folded scale embed
        bd1_all.astype(f32),
        wd2.astype(compute_dtype), bd2.astype(f32),            # head L2
        wd3.reshape(1, -1).astype(compute_dtype),              # (1, 128) head L3 row
        bd3.astype(f32),                                       # (1, 1)
    )


# -----------------------------------------------------------------------------
# Forward wrapper
# -----------------------------------------------------------------------------
@functools.partial(jax.jit, static_argnames=("batch_tile",))
def discriminator_forward(meas_in, params_in, obs, pos, scale, fused, *, batch_tile=1024):
    """Mirror of Discriminator.forward. `pos` is accepted but unused (as in PyTorch)."""
    del pos  # unused in the reference forward()
    B = meas_in.shape[0]
    f32 = jnp.float32

    # obs_flat = cat(obs.real, obs.imag, -1).flatten(1) -> (B, 32)   [plain-JAX glue]
    obs_flat = jnp.concatenate([jnp.real(obs), jnp.imag(obs)], axis=-1).reshape(B, -1)

    # Single activation input: [obs(32) | params | meas | scale]  -> one DMA per step.
    act = jnp.concatenate(
        [obs_flat.astype(f32), params_in.astype(f32), meas_in.astype(f32), scale.astype(f32)],
        axis=-1)                                               # (B, 35) f32
    F = act.shape[1]

    # --- batch tile selection -------------------------------------------------
    # Multiple of 16 (safe sublane packing for in-kernel bf16 casts).
    TB = min(max(batch_tile, 16), _round_up(B, 16))
    if B >= 32:
        # At least 2 grid tiles so dimension_semantics=("parallel",) can shard the
        # batch axis across v7x's 2 TensorCores (no-op on v5e/v6e).
        TB = min(TB, _round_up((B + 1) // 2, 16))
    TB = max(TB, 16)
    B_pad = _round_up(B, TB)
    n_tiles = B_pad // TB

    if B_pad != B:
        act = jnp.pad(act, ((0, B_pad - B), (0, 0)))

    # Activations: tiled over batch, double-buffered by the Pallas pipeline.
    act_spec = pl.BlockSpec((TB, F), lambda i: (i, 0))
    # Weights: full blocks, constant index_map -> VMEM-resident across the grid.
    w_specs = [pl.BlockSpec(w.shape, lambda i: (0, 0)) for w in fused]

    out = pl.pallas_call(
        discriminator_kernel,
        # Lane-dense output: one (1, TB) row per grid tile.
        out_shape=jax.ShapeDtypeStruct((n_tiles, 1, TB), jnp.float32),
        grid=(n_tiles,),
        in_specs=[act_spec] + w_specs,
        out_specs=pl.BlockSpec((1, 1, TB), lambda i: (i, 0, 0)),
        compiler_params=pltpu.CompilerParams(
            dimension_semantics=("parallel",),   # shard batch tiles across TCs on v7x
            vmem_limit_bytes=32 << 20,           # fits (1024,512) f32 intermediates; < v7x 64 MiB
        ),
    )(act, *fused)

    return out.reshape(B_pad, 1)[:B]


# -----------------------------------------------------------------------------
# Pure-JAX reference (original module semantics, f32)
# -----------------------------------------------------------------------------
def reference_forward(meas_in, params_in, obs, pos, scale, p):
    del pos
    B = meas_in.shape[0]
    obs_flat = jnp.concatenate([jnp.real(obs), jnp.imag(obs)], axis=-1).reshape(B, -1)
    obs_ebd = obs_flat @ p["obs"][0] + p["obs"][1]
    meas_ebd = meas_in @ p["meas"][0] + p["meas"][1]
    param_ebd = params_in @ p["param"][0] + p["param"][1]
    scale_ebd = scale @ p["scale"][0] + p["scale"][1]
    x = jnp.concatenate([param_ebd, obs_ebd], axis=1)
    x = _leaky(x @ p["bb1"][0] + p["bb1"][1])
    x = _leaky(x @ p["bb2"][0] + p["bb2"][1])
    x = x @ p["bb3"][0] + p["bb3"][1]
    cat = jnp.concatenate([x, meas_ebd, scale_ebd], axis=1)
    y = _leaky(cat @ p["d1"][0] + p["d1"][1])
    y = _leaky(y @ p["d2"][0] + p["d2"][1])
    return y @ p["d3"][0] + p["d3"][1]


if __name__ == "__main__":
    key = jax.random.PRNGKey(0)
    k_p, k_m, k_pa, k_or, k_oi, k_s = jax.random.split(key, 6)

    B = 2
    num_miti = 8  # only stored on the module; unused in forward

    params_model = init_params(k_p)

    meas_in = jax.random.normal(k_m, (B, 1), jnp.float32)
    params_in = jax.random.normal(k_pa, (B, 1), jnp.float32)
    obs = (jax.random.normal(k_or, (B, 8, 2, 1), jnp.float32)
           + 1j * jax.random.normal(k_oi, (B, 8, 2, 1), jnp.float32)).astype(jnp.complex64)
    pos = jnp.zeros((B, num_miti), jnp.int32)  # unused by forward
    scale = jax.random.normal(k_s, (B, 1), jnp.float32)

    ref = reference_forward(meas_in, params_in, obs, pos, scale, params_model)

    # 1) near-exact check: f32 matmul operands (folds only reassociate f32 math)
    fused_f32 = prepare_params(params_model, compute_dtype=jnp.float32)
    out_f32 = jax.block_until_ready(
        discriminator_forward(meas_in, params_in, obs, pos, scale, fused_f32))
    assert out_f32.shape == (B, 1), out_f32.shape
    assert jnp.allclose(out_f32, ref, atol=2e-3, rtol=2e-3), (out_f32, ref)

    # 2) optimized path: bf16 matmul operands, f32 accumulation / elementwise
    fused_bf16 = prepare_params(params_model, compute_dtype=jnp.bfloat16)
    out_bf16 = jax.block_until_ready(
        discriminator_forward(meas_in, params_in, obs, pos, scale, fused_bf16))
    assert out_bf16.shape == (B, 1), out_bf16.shape
    assert jnp.allclose(out_bf16, ref, atol=1e-1, rtol=1e-1), (out_bf16, ref)

    print("KERNEL_OK")
</pallas_src>

<mosaic_0001>
module attributes {stable_mosaic.version = 11 : i64} {
  func.func @discriminator_kernel(%arg0: i32, %arg1: memref<16x35xf32, #tpu.memory_space<vmem>>, %arg2: memref<33x512xf32, #tpu.memory_space<vmem>>, %arg3: memref<1x512xf32, #tpu.memory_space<vmem>>, %arg4: memref<512x512xf32, #tpu.memory_space<vmem>>, %arg5: memref<1x512xf32, #tpu.memory_space<vmem>>, %arg6: memref<512x256xf32, #tpu.memory_space<vmem>>, %arg7: memref<1x256xf32, #tpu.memory_space<vmem>>, %arg8: memref<1x256xf32, #tpu.memory_space<vmem>>, %arg9: memref<1x256xf32, #tpu.memory_space<vmem>>, %arg10: memref<256x128xf32, #tpu.memory_space<vmem>>, %arg11: memref<1x128xf32, #tpu.memory_space<vmem>>, %arg12: memref<1x128xf32, #tpu.memory_space<vmem>>, %arg13: memref<1x1xf32, #tpu.memory_space<vmem>>, %arg14: memref<1x1x16xf32, #tpu.memory_space<vmem>>) attributes {dimension_semantics = [#tpu.dimension_semantics<parallel>], iteration_bounds = array<i64: 1>, scalar_prefetch = 0 : i64, scratch_operands = 0 : i64, tpu.core_type = #tpu.core_type<tc>, window_params = [{transform_indices = @transform_0, window_bounds = array<i64: 16, 35>}, {pipeline_mode = #tpu.pipeline_mode<synchronous>, transform_indices = @transform_1, window_bounds = array<i64: 33, 512>}, {pipeline_mode = #tpu.pipeline_mode<synchronous>, transform_indices = @transform_2, window_bounds = array<i64: 1, 512>}, {pipeline_mode = #tpu.pipeline_mode<synchronous>, transform_indices = @transform_3, window_bounds = array<i64: 512, 512>}, {pipeline_mode = #tpu.pipeline_mode<synchronous>, transform_indices = @transform_4, window_bounds = array<i64: 1, 512>}, {pipeline_mode = #tpu.pipeline_mode<synchronous>, transform_indices = @transform_5, window_bounds = array<i64: 512, 256>}, {pipeline_mode = #tpu.pipeline_mode<synchronous>, transform_indices = @transform_6, window_bounds = array<i64: 1, 256>}, {pipeline_mode = #tpu.pipeline_mode<synchronous>, transform_indices = @transform_7, window_bounds = array<i64: 1, 256>}, {pipeline_mode = #tpu.pipeline_mode<synchronous>, transform_indices = @transform_8, window_bounds = array<i64: 1, 256>}, {pipeline_mode = #tpu.pipeline_mode<synchronous>, transform_indices = @transform_9, window_bounds = array<i64: 256, 128>}, {pipeline_mode = #tpu.pipeline_mode<synchronous>, transform_indices = @transform_10, window_bounds = array<i64: 1, 128>}, {pipeline_mode = #tpu.pipeline_mode<synchronous>, transform_indices = @transform_11, window_bounds = array<i64: 1, 128>}, {pipeline_mode = #tpu.pipeline_mode<synchronous>, transform_indices = @transform_12, window_bounds = array<i64: 1, 1>}, {transform_indices = @transform_13, window_bounds = array<i64: 1, 1, 16>}]} {
    %c0 = arith.constant 0 : index
    %c0_0 = arith.constant 0 : index
    %0 = vector.load %arg1[%c0, %c0_0] : memref<16x35xf32, #tpu.memory_space<vmem>>, vector<16x35xf32>
    %1 = vector.extract_strided_slice %0 {offsets = [0, 0], sizes = [16, 33], strides = [1, 1]} : vector<16x35xf32> to vector<16x33xf32>
    %2 = vector.extract_strided_slice %0 {offsets = [0, 33], sizes = [16, 1], strides = [1, 1]} : vector<16x35xf32> to vector<16x1xf32>
    %3 = vector.extract_strided_slice %0 {offsets = [0, 34], sizes = [16, 1], strides = [1, 1]} : vector<16x35xf32> to vector<16x1xf32>
    %c0_1 = arith.constant 0 : index
    %c0_2 = arith.constant 0 : index
    %4 = vector.load %arg2[%c0_1, %c0_2] : memref<33x512xf32, #tpu.memory_space<vmem>>, vector<33x512xf32>
    %cst = arith.constant dense<0.000000e+00> : vector<16x512xf32>
    %5 = tpu.matmul %1, %4, %cst {dimension_numbers = #tpu.dot_dimension_numbers<[1], [0], [0], [1], [0, 0, 1, 1], [], []>} : vector<16x33xf32>, vector<33x512xf32>, vector<16x512xf32> -> vector<16x512xf32>
    %c0_3 = arith.constant 0 : index
    %c0_4 = arith.constant 0 : index
    %6 = vector.load %arg3[%c0_3, %c0_4] : memref<1x512xf32, #tpu.memory_space<vmem>>, vector<1x512xf32>
    %7 = vector.broadcast %6 : vector<1x512xf32> to vector<16x512xf32>
    %8 = arith.addf %5, %7 : vector<16x512xf32>
    %cst_5 = arith.constant 2.000000e-01 : f32
    %9 = vector.broadcast %cst_5 : f32 to vector<16x512xf32>
    %10 = arith.mulf %9, %8 : vector<16x512xf32>
    %11 = arith.maximumf %8, %10 : vector<16x512xf32>
    %c0_6 = arith.constant 0 : index
    %c0_7 = arith.constant 0 : index
    %12 = vector.load %arg4[%c0_6, %c0_7] : memref<512x512xf32, #tpu.memory_space<vmem>>, vector<512x512xf32>
    %cst_8 = arith.constant dense<0.000000e+00> : vector<16x512xf32>
    %13 = tpu.matmul %11, %12, %cst_8 {dimension_numbers = #tpu.dot_dimension_numbers<[1], [0], [0], [1], [0, 0, 1, 1], [], []>} : vector<16x512xf32>, vector<512x512xf32>, vector<16x512xf32> -> vector<16x512xf32>
    %c0_9 = arith.constant 0 : index
    %c0_10 = arith.constant 0 : index
    %14 = vector.load %arg5[%c0_9, %c0_10] : memref<1x512xf32, #tpu.memory_space<vmem>>, vector<1x512xf32>
    %15 = vector.broadcast %14 : vector<1x512xf32> to vector<16x512xf32>
    %16 = arith.addf %13, %15 : vector<16x512xf32>
    %cst_11 = arith.constant 2.000000e-01 : f32
    %17 = vector.broadcast %cst_11 : f32 to vector<16x512xf32>
    %18 = arith.mulf %17, %16 : vector<16x512xf32>
    %19 = arith.maximumf %16, %18 : vector<16x512xf32>
    %c0_12 = arith.constant 0 : index
    %c0_13 = arith.constant 0 : index
    %20 = vector.load %arg6[%c0_12, %c0_13] : memref<512x256xf32, #tpu.memory_space<vmem>>, vector<512x256xf32>
    %cst_14 = arith.constant dense<0.000000e+00> : vector<16x256xf32>
    %21 = tpu.matmul %19, %20, %cst_14 {dimension_numbers = #tpu.dot_dimension_numbers<[1], [0], [0], [1], [0, 0, 1, 1], [], []>} : vector<16x512xf32>, vector<512x256xf32>, vector<16x256xf32> -> vector<16x256xf32>
    %c0_15 = arith.constant 0 : index
    %c0_16 = arith.constant 0 : index
    %22 = vector.load %arg7[%c0_15, %c0_16] : memref<1x256xf32, #tpu.memory_space<vmem>>, vector<1x256xf32>
    %23 = vector.broadcast %2 : vector<16x1xf32> to vector<16x256xf32>
    %24 = vector.broadcast %22 : vector<1x256xf32> to vector<16x256xf32>
    %25 = arith.mulf %23, %24 : vector<16x256xf32>
    %26 = arith.addf %21, %25 : vector<16x256xf32>
    %c0_17 = arith.constant 0 : index
    %c0_18 = arith.constant 0 : index
    %27 = vector.load %arg8[%c0_17, %c0_18] : memref<1x256xf32, #tpu.memory_space<vmem>>, vector<1x256xf32>
    %28 = vector.broadcast %3 : vector<16x1xf32> to vector<16x256xf32>
    %29 = vector.broadcast %27 : vector<1x256xf32> to vector<16x256xf32>
    %30 = arith.mulf %28, %29 : vector<16x256xf32>
    %31 = arith.addf %26, %30 : vector<16x256xf32>
    %c0_19 = arith.constant 0 : index
    %c0_20 = arith.constant 0 : index
    %32 = vector.load %arg9[%c0_19, %c0_20] : memref<1x256xf32, #tpu.memory_space<vmem>>, vector<1x256xf32>
    %33 = vector.broadcast %32 : vector<1x256xf32> to vector<16x256xf32>
    %34 = arith.addf %31, %33 : vector<16x256xf32>
    %cst_21 = arith.constant 2.000000e-01 : f32
    %35 = vector.broadcast %cst_21 : f32 to vector<16x256xf32>
    %36 = arith.mulf %35, %34 : vector<16x256xf32>
    %37 = arith.maximumf %34, %36 : vector<16x256xf32>
    %c0_22 = arith.constant 0 : index
    %c0_23 = arith.constant 0 : index
    %38 = vector.load %arg10[%c0_22, %c0_23] : memref<256x128xf32, #tpu.memory_space<vmem>>, vector<256x128xf32>
    %cst_24 = arith.constant dense<0.000000e+00> : vector<16x128xf32>
    %39 = tpu.matmul %37, %38, %cst_24 {dimension_numbers = #tpu.dot_dimension_numbers<[1], [0], [0], [1], [0, 0, 1, 1], [], []>} : vector<16x256xf32>, vector<256x128xf32>, vector<16x128xf32> -> vector<16x128xf32>
    %c0_25 = arith.constant 0 : index
    %c0_26 = arith.constant 0 : index
    %40 = vector.load %arg11[%c0_25, %c0_26] : memref<1x128xf32, #tpu.memory_space<vmem>>, vector<1x128xf32>
    %41 = vector.broadcast %40 : vector<1x128xf32> to vector<16x128xf32>
    %42 = arith.addf %39, %41 : vector<16x128xf32>
    %cst_27 = arith.constant 2.000000e-01 : f32
    %43 = vector.broadcast %cst_27 : f32 to vector<16x128xf32>
    %44 = arith.mulf %43, %42 : vector<16x128xf32>
    %45 = arith.maximumf %42, %44 : vector<16x128xf32>
    %c0_28 = arith.constant 0 : index
    %c0_29 = arith.constant 0 : index
    %46 = vector.load %arg12[%c0_28, %c0_29] : memref<1x128xf32, #tpu.memory_space<vmem>>, vector<1x128xf32>
    %cst_30 = arith.constant dense<0.000000e+00> : vector<1x16xf32>
    %47 = tpu.matmul %46, %45, %cst_30 {dimension_numbers = #tpu.dot_dimension_numbers<[1], [1], [0], [0], [0, 0, 1, 0], [], []>} : vector<1x128xf32>, vector<16x128xf32>, vector<1x16xf32> -> vector<1x16xf32>
    %c0_31 = arith.constant 0 : index
    %c0_32 = arith.constant 0 : index
    %48 = vector.load %arg13[%c0_31, %c0_32] : memref<1x1xf32, #tpu.memory_space<vmem>>, vector<1x1xf32>
    %49 = vector.broadcast %48 : vector<1x1xf32> to vector<1x16xf32>
    %50 = arith.addf %47, %49 : vector<1x16xf32>
    %c0_33 = arith.constant 0 : index
    %c0_34 = arith.constant 0 : index
    %c0_35 = arith.constant 0 : index
    %51 = vector.load %arg14[%c0_33, %c0_34, %c0_35] : memref<1x1x16xf32, #tpu.memory_space<vmem>>, vector<1x1x16xf32>
    %52 = vector.shape_cast %51 : vector<1x1x16xf32> to vector<1x16xf32>
    %53 = vector.shape_cast %50 : vector<1x16xf32> to vector<1x1x16xf32>
    tpu.vector_store %arg14[%c0_33, %c0_34, %c0_35], %53 {strides = array<i32>} : memref<1x1x16xf32, #tpu.memory_space<vmem>>, vector<1x1x16xf32>,
    return
  }
  func.func @transform_0(%arg0: i32) -> (i32, i32) {
    %c0_i32 = arith.constant 0 : i32
    %c0_i32_0 = arith.constant 0 : i32
    return %arg0, %c0_i32 : i32, i32
  }
  func.func @transform_1(%arg0: i32) -> (i32, i32) {
    %c0_i32 = arith.constant 0 : i32
    %c0_i32_0 = arith.constant 0 : i32
    %c0_i32_1 = arith.constant 0 : i32
    return %c0_i32, %c0_i32_0 : i32, i32
  }
  func.func @transform_2(%arg0: i32) -> (i32, i32) {
    %c0_i32 = arith.constant 0 : i32
    %c0_i32_0 = arith.constant 0 : i32
    %c0_i32_1 = arith.constant 0 : i32
    return %c0_i32, %c0_i32_0 : i32, i32
  }
  func.func @transform_3(%arg0: i32) -> (i32, i32) {
    %c0_i32 = arith.constant 0 : i32
    %c0_i32_0 = arith.constant 0 : i32
    %c0_i32_1 = arith.constant 0 : i32
    return %c0_i32, %c0_i32_0 : i32, i32
  }
  func.func @transform_4(%arg0: i32) -> (i32, i32) {
    %c0_i32 = arith.constant 0 : i32
    %c0_i32_0 = arith.constant 0 : i32
    %c0_i32_1 = arith.constant 0 : i32
    return %c0_i32, %c0_i32_0 : i32, i32
  }
  func.func @transform_5(%arg0: i32) -> (i32, i32) {
    %c0_i32 = arith.constant 0 : i32
    %c0_i32_0 = arith.constant 0 : i32
    %c0_i32_1 = arith.constant 0 : i32
    return %c0_i32, %c0_i32_0 : i32, i32
  }
  func.func @transform_6(%arg0: i32) -> (i32, i32) {
    %c0_i32 = arith.constant 0 : i32
    %c0_i32_0 = arith.constant 0 : i32
    %c0_i32_1 = arith.constant 0 : i32
    return %c0_i32, %c0_i32_0 : i32, i32
  }
  func.func @transform_7(%arg0: i32) -> (i32, i32) {
    %c0_i32 = arith.constant 0 : i32
    %c0_i32_0 = arith.constant 0 : i32
    %c0_i32_1 = arith.constant 0 : i32
    return %c0_i32, %c0_i32_0 : i32, i32
  }
  func.func @transform_8(%arg0: i32) -> (i32, i32) {
    %c0_i32 = arith.constant 0 : i32
    %c0_i32_0 = arith.constant 0 : i32
    %c0_i32_1 = arith.constant 0 : i32
    return %c0_i32, %c0_i32_0 : i32, i32
  }
  func.func @transform_9(%arg0: i32) -> (i32, i32) {
    %c0_i32 = arith.constant 0 : i32
    %c0_i32_0 = arith.constant 0 : i32
    %c0_i32_1 = arith.constant 0 : i32
    return %c0_i32, %c0_i32_0 : i32, i32
  }
  func.func @transform_10(%arg0: i32) -> (i32, i32) {
    %c0_i32 = arith.constant 0 : i32
    %c0_i32_0 = arith.constant 0 : i32
    %c0_i32_1 = arith.constant 0 : i32
    return %c0_i32, %c0_i32_0 : i32, i32
  }
  func.func @transform_11(%arg0: i32) -> (i32, i32) {
    %c0_i32 = arith.constant 0 : i32
    %c0_i32_0 = arith.constant 0 : i32
    %c0_i32_1 = arith.constant 0 : i32
    return %c0_i32, %c0_i32_0 : i32, i32
  }
  func.func @transform_12(%arg0: i32) -> (i32, i32) {
    %c0_i32 = arith.constant 0 : i32
    %c0_i32_0 = arith.constant 0 : i32
    %c0_i32_1 = arith.constant 0 : i32
    return %c0_i32, %c0_i32_0 : i32, i32
  }
  func.func @transform_13(%arg0: i32) -> (i32, i32, i32) {
    %c0_i32 = arith.constant 0 : i32
    %c0_i32_0 = arith.constant 0 : i32
    %c0_i32_1 = arith.constant 0 : i32
    return %arg0, %c0_i32, %c0_i32_0 : i32, i32, i32
  }
}

</mosaic_0001>

<llo_original>
// kernel: custom-call.1
$region0: #{custom-call.1}
  %s0 = inlined_call_operand.hbm [shape: c64[2,8,2,1], index: 0, kind: input, shape index: {}]
  %s1 = inlined_call_operand.vmem [shape: f32[2,8,2,1], index: 1, kind: output, shape index: {}]
  %s2 = scalar_lea.hbm %s0, 64
  $region1: #{custom-call.1} parent=0
    #allocation0 [shape = 's32[1]{0}', space=sflag, size = 0x4, scoped, tag = 'scoped memory for custom-call.1']
    %3 = vsyncpa [#allocation0], 0
    %s4 = sshll.u32 %s1, 4
    %s5 = int_to_ptr.vmem [resolvable:$true] %s4
    %7 = dma.hbm_to_vmem [thread:$0]  %s2, 64, %s5, [#allocation0]
    %8 = dma.done [#allocation0], 64
    %9 = vsyncpa [#allocation0], 1

// kernel: custom-call
$region0: #{custom-call}
  %s0 = inlined_call_operand.hbm [shape: c64[2,8,2,1], index: 0, kind: input, shape index: {}]
  %s1 = inlined_call_operand.vmem [shape: f32[2,8,2,1], index: 1, kind: output, shape index: {}]
  $region1: #{custom-call} parent=0
    #allocation0 [shape = 's32[1]{0}', space=sflag, size = 0x4, scoped, tag = 'scoped memory for custom-call']
    %2 = vsyncpa [#allocation0], 0
    %s3 = sshll.u32 %s1, 4
    %s4 = int_to_ptr.vmem [resolvable:$true] %s3
    %6 = dma.hbm_to_vmem [thread:$0]  %s0, 64, %s4, [#allocation0]
    %7 = dma.done [#allocation0], 64
    %8 = vsyncpa [#allocation0], 1

// kernel: discriminator_forward.1
$region0: #{discriminator_forward.1}
  #allocation0 [shape = 'u32[]', space=smem, size = 0x4, offset = 0x4, fixed_abs, tag = 'smem constant byte address 0x4 - core index']
  #allocation1 [shape = 'u32[144,128]{1,0:T(1,128)}', space=vmem, size = 0x12000, scoped, tag = 'internal scratch']
  #allocation2 [shape = 'f32[1,1]{1,0:T(1,128)S(1)}', space=vmem, size = 0x200, scoped, tag = 'scoped memory for discriminator_forward.1']
  %s0 = inlined_call_operand.vmem [shape: f32[16,35], index: 0, kind: input, shape index: {}]
  %s1 = inlined_call_operand.vmem [shape: f32[33,512], index: 1, kind: input, shape index: {}]
  %s2 = inlined_call_operand.vmem [shape: f32[1,512], index: 2, kind: input, shape index: {}]
  %s3 = inlined_call_operand.hbm [shape: f32[512,512], index: 3, kind: input, shape index: {}]
  %s4 = inlined_call_operand.vmem [shape: f32[1,512], index: 4, kind: input, shape index: {}]
  %s5 = inlined_call_operand.hbm [shape: f32[512,256], index: 5, kind: input, shape index: {}]
  %s6 = inlined_call_operand.vmem [shape: f32[1,256], index: 6, kind: input, shape index: {}]
  %s7 = inlined_call_operand.vmem [shape: f32[1,256], index: 7, kind: input, shape index: {}]
  %s8 = inlined_call_operand.vmem [shape: f32[1,256], index: 8, kind: input, shape index: {}]
  %s9 = inlined_call_operand.hbm [shape: f32[256,128], index: 9, kind: input, shape index: {}]
  %s10 = inlined_call_operand.hbm [shape: f32[1,128], index: 10, kind: input, shape index: {}]
  %s11 = inlined_call_operand.hbm [shape: f32[1,128], index: 11, kind: input, shape index: {}]
  %s12 = inlined_call_operand.<no memory space> [shape: f32[1,1], index: 12, kind: input, shape index: {}]
  %s13 = inlined_call_operand.vmem [shape: f32[1,1,16], index: 13, kind: output, shape index: {}]
  %s14 = sld [smem:[#allocation0]]
  $region82: #{discriminator_forward.1} parent=0
    _
  %s16 = ssub.s32 1, %s14
  %s17 = scalar_select 0, %s16, %s14
  %v18 = vstv %s12
  %19 = vst [vmem:[#allocation2] sm:$0x1] %v18
  $region1: #{discriminator_forward.1} parent=0
    #allocation3 [shape = 'u8[1048576]{0}', space=vmem, size = 0x100000, scoped, tag = 'input window, operand 3, single buffered']
    #allocation4 [shape = 's32[1]{0}', space=sflag, size = 0x4, scoped, tag = 'scoped memory for discriminator_forward.1']
    #allocation5 [shape = 'u8[524288]{0}', space=vmem, size = 0x80000, scoped, tag = 'input window, operand 5, single buffered']
    #allocation6 [shape = 's32[1]{0}', space=sflag, size = 0x4, scoped, tag = 'scoped memory for discriminator_forward.1']
    #allocation7 [shape = 'u8[131072]{0}', space=vmem, size = 0x20000, scoped, tag = 'input window, operand 9, single buffered']
    #allocation8 [shape = 'u8[512]{0}', space=vmem, size = 0x400, scoped, tag = 'input window, operand 10, single buffered']
    #allocation9 [shape = 's32[1]{0}', space=sflag, size = 0x4, scoped, tag = 'scoped memory for discriminator_forward.1']
    #allocation10 [shape = 'u8[512]{0}', space=vmem, size = 0x400, scoped, tag = 'input window, operand 11, single buffered']
    %20 = vsyncpa [#allocation4], 0
    %21 = vsyncpa [#allocation6], 0
    %22 = vsyncpa [#allocation9], 0
    // Predicated region
    $region2: #{discriminator_forward.1} parent=1 // pred_check
      _
    $region3: #{discriminator_forward.1} parent=1 // pred_check_branch
      %24 = sbr.rel (0) target = $region5
    $region4: #{discriminator_forward.1} parent=1 // pred_region
      _
    $region5: #{discriminator_forward.1} parent=1 // pred_fallthru
      _
    // Predicated region
    $region6: #{discriminator_forward.1} parent=1 // pred_check
      _
    $region7: #{discriminator_forward.1} parent=1 // pred_check_branch
      %26 = sbr.rel (0) target = $region9
    $region8: #{discriminator_forward.1} parent=1 // pred_region
      _
    $region9: #{discriminator_forward.1} parent=1 // pred_fallthru
      _
    // Predicated region
    $region10: #{discriminator_forward.1} parent=1 // pred_check
      _
    $region11: #{discriminator_forward.1} parent=1 // pred_check_branch
      %28 = sbr.rel (0) target = $region13
    $region12: #{discriminator_forward.1} parent=1 // pred_region
      _
    $region13: #{discriminator_forward.1} parent=1 // pred_fallthru
      _
    // Predicated region
    $region14: #{discriminator_forward.1} parent=1 // pred_check
      _
    $region15: #{discriminator_forward.1} parent=1 // pred_check_branch
      %30 = sbr.rel (0) target = $region17
    $region16: #{discriminator_forward.1} parent=1 // pred_region
      %s32 = ssub.s32 32768, 32768
      %33 = vsyncadd [#allocation4], %s32
      %s34 = sshll.u32 [#allocation3], 4
      %s35 = int_to_ptr.vmem [resolvable:$true] %s34
      %40 = dma.hbm_to_vmem [thread:$0]  %s3, 32768, %s35, [#allocation4], 512, 512, 32
    $region17: #{discriminator_forward.1} parent=1 // pred_fallthru
      _
    // Predicated region
    $region18: #{discriminator_forward.1} parent=1 // pred_check
      _
    $region19: #{discriminator_forward.1} parent=1 // pred_check_branch
      %42 = sbr.rel (0) target = $region21
    $region20: #{discriminator_forward.1} parent=1 // pred_region
      _
    $region21: #{discriminator_forward.1} parent=1 // pred_fallthru
      _
    // Predicated region
    $region22: #{discriminator_forward.1} parent=1 // pred_check
      _
    $region23: #{discriminator_forward.1} parent=1 // pred_check_branch
      %44 = sbr.rel (0) target = $region25
    $region24: #{discriminator_forward.1} parent=1 // pred_region
      %s46 = ssub.s32 16384, 16384
      %47 = vsyncadd [#allocation6], %s46
      %s48 = sshll.u32 [#allocation5], 4
      %s49 = int_to_ptr.vmem [resolvable:$true] %s48
      %54 = dma.hbm_to_vmem [thread:$0]  %s5, 16384, %s49, [#allocation6], 256, 256, 16
    $region25: #{discriminator_forward.1} parent=1 // pred_fallthru
      _
    // Predicated region
    $region26: #{discriminator_forward.1} parent=1 // pred_check
      _
    $region27: #{discriminator_forward.1} parent=1 // pred_check_branch
      %56 = sbr.rel (0) target = $region29
    $region28: #{discriminator_forward.1} parent=1 // pred_region
      _
    $region29: #{discriminator_forward.1} parent=1 // pred_fallthru
      _
    // Predicated region
    $region30: #{discriminator_forward.1} parent=1 // pred_check
      _
    $region31: #{discriminator_forward.1} parent=1 // pred_check_branch
      %58 = sbr.rel (0) target = $region33
    $region32: #{discriminator_forward.1} parent=1 // pred_region
      _
    $region33: #{discriminator_forward.1} parent=1 // pred_fallthru
      _
    // Predicated region
    $region34: #{discriminator_forward.1} parent=1 // pred_check
      _
    $region35: #{discriminator_forward.1} parent=1 // pred_check_branch
      %60 = sbr.rel (0) target = $region37
    $region36: #{discriminator_forward.1} parent=1 // pred_region
      _
    $region37: #{discriminator_forward.1} parent=1 // pred_fallthru
      _
    // Predicated region
    $region38: #{discriminator_forward.1} parent=1 // pred_check
      _
    $region39: #{discriminator_forward.1} parent=1 // pred_check_branch
      %62 = sbr.rel (0) target = $region41
    $region40: #{discriminator_forward.1} parent=1 // pred_region
      %s64 = ssub.s32 4096, 4096
      %65 = vsyncadd [#allocation6], %s64
      %s66 = sshll.u32 [#allocation7], 4
      %s67 = int_to_ptr.vmem [resolvable:$true] %s66
      %72 = dma.hbm_to_vmem [thread:$0]  %s9, 4096, %s67, [#allocation6], 128, 128, 8
    $region41: #{discriminator_forward.1} parent=1 // pred_fallthru
      _
    // Predicated region
    $region42: #{discriminator_forward.1} parent=1 // pred_check
      _
    $region43: #{discriminator_forward.1} parent=1 // pred_check_branch
      %74 = sbr.rel (0) target = $region45
    $region44: #{discriminator_forward.1} parent=1 // pred_region
      %s76 = ssub.s32 16, 16
      %77 = vsyncadd [#allocation9], %s76
      %s79 = sshll.u32 [#allocation8], 4
      %s80 = int_to_ptr.vmem [resolvable:$true] %s79
      %82 = dma.hbm_to_vmem [thread:$0]  %s10, 16, %s80, [#allocation9]
    $region45: #{discriminator_forward.1} parent=1 // pred_fallthru
      _
    // Predicated region
    $region46: #{discriminator_forward.1} parent=1 // pred_check
      _
    $region47: #{discriminator_forward.1} parent=1 // pred_check_branch
      %84 = sbr.rel (0) target = $region49
    $region48: #{discriminator_forward.1} parent=1 // pred_region
      %s86 = ssub.s32 16, 16
      %87 = vsyncadd [#allocation9], %s86
      %s89 = sshll.u32 [#allocation10], 4
      %s90 = int_to_ptr.vmem [resolvable:$true] %s89
      %92 = dma.hbm_to_vmem [thread:$0]  %s11, 16, %s90, [#allocation9]
    $region49: #{discriminator_forward.1} parent=1 // pred_fallthru
      _
    // Predicated region
    $region50: #{discriminator_forward.1} parent=1 // pred_check
      _
    $region51: #{discriminator_forward.1} parent=1 // pred_check_branch
      %94 = sbr.rel (0) target = $region53
    $region52: #{discriminator_forward.1} parent=1 // pred_region
      _
    $region53: #{discriminator_forward.1} parent=1 // pred_fallthru
      _
    // Predicated region
    $region54: #{discriminator_forward.1} parent=1 // pred_check
      _
    $region55: #{discriminator_forward.1} parent=1 // pred_check_branch
      %96 = sbr.rel (0) target = $region57
    $region56: #{discriminator_forward.1} parent=1 // pred_region
      %97 = dma.done [#allocation4], 32768
    $region57: #{discriminator_forward.1} parent=1 // pred_fallthru
      _
    // Predicated region
    $region58: #{discriminator_forward.1} parent=1 // pred_check
      _
    $region59: #{discriminator_forward.1} parent=1 // pred_check_branch
      %99 = sbr.rel (0) target = $region61
    $region60: #{discriminator_forward.1} parent=1 // pred_region
      %100 = dma.done [#allocation6], 16384
    $region61: #{discriminator_forward.1} parent=1 // pred_fallthru
      _
    // Predicated region
    $region62: #{discriminator_forward.1} parent=1 // pred_check
      _
    $region63: #{discriminator_forward.1} parent=1 // pred_check_branch
      %102 = sbr.rel (0) target = $region65
    $region64: #{discriminator_forward.1} parent=1 // pred_region
      %103 = dma.done [#allocation6], 4096
    $region65: #{discriminator_forward.1} parent=1 // pred_fallthru
      _
    // Predicated region
    $region66: #{discriminator_forward.1} parent=1 // pred_check
      _
    $region67: #{discriminator_forward.1} parent=1 // pred_check_branch
      %105 = sbr.rel (0) target = $region69
    $region68: #{discriminator_forward.1} parent=1 // pred_region
      %106 = dma.done [#allocation9], 16
    $region69: #{discriminator_forward.1} parent=1 // pred_fallthru
      _
    // Predicated region
    $region70: #{discriminator_forward.1} parent=1 // pred_check
      _
    $region71: #{discriminator_forward.1} parent=1 // pred_check_branch
      %108 = sbr.rel (0) target = $region73
    $region72: #{discriminator_forward.1} parent=1 // pred_region
      %109 = dma.done [#allocation9], 16
    $region73: #{discriminator_forward.1} parent=1 // pred_fallthru
      _
    %v110 = vld [vmem:[%s0] sm:$0xff]
    %v111 = vld [vmem:[%s0 + $0x8] sm:$0xff]
    %v112 = vld [vmem:[%s1] sm:$0xff]
    %v113 = vld [vmem:[%s1 + $0x8] sm:$0xff]
    %v114 = vld [vmem:[%s1 + $0x10] sm:$0xff]
    %v115 = vld [vmem:[%s1 + $0x18] sm:$0xff]
    %v116 = vld [vmem:[%s1 + $0x20] sm:$0xff]
    %v117 = vld [vmem:[%s1 + $0x28] sm:$0xff]
    %v118 = vld [vmem:[%s1 + $0x30] sm:$0xff]
    %v119 = vld [vmem:[%s1 + $0x38] sm:$0xff]
    %v120 = vld [vmem:[%s1 + $0x40] sm:$0xff]
    %v121 = vld [vmem:[%s1 + $0x48] sm:$0xff]
    %v122 = vld [vmem:[%s1 + $0x50] sm:$0xff]
    %v123 = vld [vmem:[%s1 + $0x58] sm:$0xff]
    %v124 = vld [vmem:[%s1 + $0x60] sm:$0xff]
    %v125 = vld [vmem:[%s1 + $0x68] sm:$0xff]
    %v126 = vld [vmem:[%s1 + $0x70] sm:$0xff]
    %v127 = vld [vmem:[%s1 + $0x78] sm:$0xff]
    %v128 = vld [vmem:[%s1 + $0x80] sm:$0x1]
    %v129 = vld [vmem:[%s1 + $0x88] sm:$0x1]
    %v130 = vld [vmem:[%s1 + $0x90] sm:$0x1]
    %v131 = vld [vmem:[%s1 + $0x98] sm:$0x1]
    %v132 = vld [vmem:[%s2] sm:$0xf]
    %v134 = vlaneseq
    %v135 = vshrl.u32 %v134, 7
    %v136 = vsub.s32 0, %v135
    %v137 = vrot.slane %v132, %v136
    %v138 = vlaneseq
    %v139 = vshrl.u32 %v138, 7
    %v140 = vsub.s32 1, %v139
    %v141 = vrot.slane %v132, %v140
    %v142 = vlaneseq
    %v143 = vshrl.u32 %v142, 7
    %v144 = vsub.s32 2, %v143
    %v145 = vrot.slane %v132, %v144
    %v146 = vlaneseq
    %v147 = vshrl.u32 %v146, 7
    %v148 = vsub.s32 3, %v147
    %v149 = vrot.slane %v132, %v148
    %vm154 = vcmask 269312
    %v156 = vsel %vm154, %v110, 0
    %v159 = vsel %vm154, %v111, 0
    %vm161 = vcmask 1040384
    %v163 = vsel %vm161, %v128, 0
    %v166 = vsel %vm161, %v129, 0
    %v169 = vsel %vm161, %v130, 0
    %v172 = vsel %vm161, %v131, 0
    %174 = vmatprep.subr.mxu0 %v113
    %175 = vmatpush1.msra.mxu0 %v112
    %176 = vmatprep.subr.mxu0 %v117
    %177 = vmatpush1.msra.mxu0 %v116
    %178 = vmatprep.subr.mxu0 %v121
    %179 = vmatpush1.msra.mxu0 %v120
    %180 = vmatprep.subr.mxu0 %v125
    %181 = vmatpush1.msra.mxu0 %v124
    %182 = vmatprep.subr.mxu0 %v166
    %183 = vmatpush1.msra.mxu0 %v163
    %184 = vmatprep.subr.mxu0 0.0
    %185 = vmatpush1.msra.mxu0 0.0
    %186 = vmatprep.subr.mxu0 0.0
    %187 = vmatpush1.msra.mxu0 0.0
    %188 = vmatprep.subr.mxu0 0.0
    %189 = vmatpush1.msra.mxu0 0.0
    %190 = vmatprep.subr.mxu0 0.0
    %191 = vmatpush1.msra.mxu0 0.0
    %192 = vmatprep.subr.mxu0 0.0
    %193 = vmatpush1.msra.mxu0 0.0
    %194 = vmatprep.subr.mxu0 0.0
    %195 = vmatpush1.msra.mxu0 0.0
    %196 = vmatprep.subr.mxu0 0.0
    %197 = vmatpush1.msra.mxu0 0.0
    %198 = vmatprep.subr.mxu0 0.0
    %199 = vmatpush1.msra.mxu0 0.0
    %200 = vmatprep.subr.mxu0 0.0
    %201 = vmatpush1.msra.mxu0 0.0
    %202 = vmatprep.subr.mxu0 0.0
    %203 = vmatpush1.msra.mxu0 0.0
    %204 = vmatprep.subr.mxu0 0.0
    %205 = vmatpush1.msra.mxu0 0.0
    %206 = vmatprep.subr.mxu0 0.0
    %207 = vmatpush1.msra.mxu0 0.0
    %208 = vmatprep.subr.mxu0 0.0
    %209 = vmatpush1.msra.mxu0 0.0
    %210 = vmatprep.subr.mxu0 0.0
    %211 = vmatpush1.msra.mxu0 0.0
    %212 = vmatprep.subr.mxu0 0.0
    %213 = vmatpush1.msra.mxu0 0.0
    %214 = vmatprep.subr.mxu0 0.0
    %215 = vmatpush1.msra.mxu0 0.0
    %216 = vmatprep.subr.mxu0 0.0
    %217 = vmatpush1.msra.mxu0 0.0
    %218 = vmatprep.subr.mxu0 0.0
    %219 = vmatpush1.msra.mxu0 0.0
    %220 = vmatprep.subr.mxu0 0.0
    %221 = vmatpush1.msra.mxu0 0.0
    %222 = vmatprep.subr.mxu0 0.0
    %223 = vmatpush1.msra.mxu0 0.0
    %224 = vmatprep.subr.mxu0 0.0
    %225 = vmatpush1.msra.mxu0 0.0
    %226 = vmatprep.subr.mxu0 0.0
    %227 = vmatpush1.msra.mxu0 0.0
    %228 = vmatprep.subr.mxu0 0.0
    %229 = vmatpush1.msra.mxu0 0.0
    %230 = vmatprep.subr.mxu0 0.0
    %231 = vmatpush1.msra.mxu0 0.0
    %232 = vmatprep.subr.mxu0 0.0
    %233 = vmatpush1.msra.mxu0 0.0
    %234 = vmatprep.subr.mxu0 0.0
    %235 = vmatpush1.msra.mxu0 0.0
    %236 = vmatprep.subr.mxu0 0.0
    %237 = vmatpush1.msra.mxu0 0.0
    %238 = vmatprep.mubr.f32.mxu0 0.0
    %239 = vmatmul.mubr.f32.gmra.mrb[0].mxu0 %v156
    %v240 = vpop.f32.mrb[0].mxu0
    %v241 = vadd.f32 %v137, %v240
    %v242 = vpop.f32.mrb[0].mxu0
    %v243 = vadd.f32 %v141, %v242
    %244 = vmatprep.mubr.f32.mxu0 0.0
    %245 = vmatmul.mubr.f32.gmra.mrb[0].mxu0 %v159
    %v246 = vpop.f32.mrb[0].mxu0
    %v247 = vadd.f32 %v137, %v246
    %v248 = vpop.f32.mrb[0].mxu0
    %v249 = vadd.f32 %v141, %v248
    %250 = vdwg.mxu0
    %251 = vmatprep.subr.mxu0 %v115
    %252 = vmatpush1.msra.mxu0 %v114
    %253 = vmatprep.subr.mxu0 %v119
    %254 = vmatpush1.msra.mxu0 %v118
    %255 = vmatprep.subr.mxu0 %v123
    %256 = vmatpush1.msra.mxu0 %v122
    %257 = vmatprep.subr.mxu0 %v127
    %258 = vmatpush1.msra.mxu0 %v126
    %259 = vmatprep.subr.mxu0 %v172
    %260 = vmatpush1.msra.mxu0 %v169
    %261 = vmatprep.subr.mxu0 0.0
    %262 = vmatpush1.msra.mxu0 0.0
    %263 = vmatprep.subr.mxu0 0.0
    %264 = vmatpush1.msra.mxu0 0.0
    %265 = vmatprep.subr.mxu0 0.0
    %266 = vmatpush1.msra.mxu0 0.0
    %267 = vmatprep.subr.mxu0 0.0
    %268 = vmatpush1.msra.mxu0 0.0
    %269 = vmatprep.subr.mxu0 0.0
    %270 = vmatpush1.msra.mxu0 0.0
    %271 = vmatprep.subr.mxu0 0.0
    %272 = vmatpush1.msra.mxu0 0.0
    %273 = vmatprep.subr.mxu0 0.0
    %274 = vmatpush1.msra.mxu0 0.0
    %275 = vmatprep.subr.mxu0 0.0
    %276 = vmatpush1.msra.mxu0 0.0
    %277 = vmatprep.subr.mxu0 0.0
    %278 = vmatpush1.msra.mxu0 0.0
    %279 = vmatprep.subr.mxu0 0.0
    %280 = vmatpush1.msra.mxu0 0.0
    %281 = vmatprep.subr.mxu0 0.0
    %282 = vmatpush1.msra.mxu0 0.0
    %283 = vmatprep.subr.mxu0 0.0
    %284 = vmatpush1.msra.mxu0 0.0
    %285 = vmatprep.subr.mxu0 0.0
    %286 = vmatpush1.msra.mxu0 0.0
    %287 = vmatprep.subr.mxu0 0.0
    %288 = vmatpush1.msra.mxu0 0.0
    %289 = vmatprep.subr.mxu0 0.0
    %290 = vmatpush1.msra.mxu0 0.0
    %291 = vmatprep.subr.mxu0 0.0
    %292 = vmatpush1.msra.mxu0 0.0
    %293 = vmatprep.subr.mxu0 0.0
    %294 = vmatpush1.msra.mxu0 0.0
    %295 = vmatprep.subr.mxu0 0.0
    %296 = vmatpush1.msra.mxu0 0.0
    %297 = vmatprep.subr.mxu0 0.0
    %298 = vmatpush1.msra.mxu0 0.0
    %299 = vmatprep.subr.mxu0 0.0
    %300 = vmatpush1.msra.mxu0 0.0
    %301 = vmatprep.subr.mxu0 0.0
    %302 = vmatpush1.msra.mxu0 0.0
    %303 = vmatprep.subr.mxu0 0.0
    %304 = vmatpush1.msra.mxu0 0.0
    %305 = vmatprep.subr.mxu0 0.0
    %306 = vmatpush1.msra.mxu0 0.0
    %307 = vmatprep.subr.mxu0 0.0
    %308 = vmatpush1.msra.mxu0 0.0
    %309 = vmatprep.subr.mxu0 0.0
    %310 = vmatpush1.msra.mxu0 0.0
    %311 = vmatprep.subr.mxu0 0.0
    %312 = vmatpush1.msra.mxu0 0.0
    %313 = vmatprep.subr.mxu0 0.0
    %314 = vmatpush1.msra.mxu0 0.0
    %315 = vmatprep.mubr.f32.mxu0 0.0
    %316 = vmatmul.mubr.f32.gmra.mrb[0].mxu0 %v156
    %v317 = vpop.f32.mrb[0].mxu0
    %v318 = vadd.f32 %v145, %v317
    %v319 = vpop.f32.mrb[0].mxu0
    %v320 = vadd.f32 %v149, %v319
    %321 = vmatprep.mubr.f32.mxu0 0.0
    %322 = vmatmul.mubr.f32.gmra.mrb[0].mxu0 %v159
    %v323 = vpop.f32.mrb[0].mxu0
    %v324 = vadd.f32 %v145, %v323
    %v325 = vpop.f32.mrb[0].mxu0
    %v326 = vadd.f32 %v149, %v325
    %327 = vdwg.mxu0
    %v328 = vmul.f32 %v241, 0.2
    %v329 = vmul.f32 %v243, 0.2
    %v330 = vmul.f32 %v318, 0.2
    %v331 = vmul.f32 %v320, 0.2
    %v332 = vmul.f32 %v247, 0.2
    %v333 = vmul.f32 %v249, 0.2
    %v334 = vmul.f32 %v324, 0.2
    %v335 = vmul.f32 %v326, 0.2
    %v336 = vmax.f32 %v241, %v328
    %v337 = vmax.f32 %v243, %v329
    %v338 = vmax.f32 %v318, %v330
    %v339 = vmax.f32 %v320, %v331
    %v340 = vmax.f32 %v247, %v332
    %v341 = vmax.f32 %v249, %v333
    %v342 = vmax.f32 %v324, %v334
    %v343 = vmax.f32 %v326, %v335
    %v344 = vld [vmem:[#allocation3] sm:$0xff]
    %v345 = vld [vmem:[#allocation3 + $0x8] sm:$0xff]
    %v346 = vld [vmem:[#allocation3 + $0x10] sm:$0xff]
    %v347 = vld [vmem:[#allocation3 + $0x18] sm:$0xff]
    %v348 = vld [vmem:[#allocation3 + $0x20] sm:$0xff]
    %v349 = vld [vmem:[#allocation3 + $0x28] sm:$0xff]
    %v350 = vld [vmem:[#allocation3 + $0x30] sm:$0xff]
    %v351 = vld [vmem:[#allocation3 + $0x38] sm:$0xff]
    %v352 = vld [vmem:[#allocation3 + $0x40] sm:$0xff]
    %v353 = vld [vmem:[#allocation3 + $0x48] sm:$0xff]
    %v354 = vld [vmem:[#allocation3 + $0x50] sm:$0xff]
    %v355 = vld [vmem:[#allocation3 + $0x58] sm:$0xff]
    %v356 = vld [vmem:[#allocation3 + $0x60] sm:$0xff]
    %v357 = vld [vmem:[#allocation3 + $0x68] sm:$0xff]
    %v358 = vld [vmem:[#allocation3 + $0x70] sm:$0xff]
    %v359 = vld [vmem:[#allocation3 + $0x78] sm:$0xff]
    %v360 = vld [vmem:[#allocation3 + $0x80] sm:$0xff]
    %v361 = vld [vmem:[#allocation3 + $0x88] sm:$0xff]
    %v362 = vld [vmem:[#allocation3 + $0x90] sm:$0xff]
    %v363 = vld [vmem:[#allocation3 + $0x98] sm:$0xff]
    %v364 = vld [vmem:[#allocation3 + $0xa0] sm:$0xff]
    %v365 = vld [vmem:[#allocation3 + $0xa8] sm:$0xff]
    %v366 = vld [vmem:[#allocation3 + $0xb0] sm:$0xff]
    %v367 = vld [vmem:[#allocation3 + $0xb8] sm:$0xff]
    %v368 = vld [vmem:[#allocation3 + $0xc0] sm:$0xff]
    %v369 = vld [vmem:[#allocation3 + $0xc8] sm:$0xff]
    %v370 = vld [vmem:[#allocation3 + $0xd0] sm:$0xff]
    %v371 = vld [vmem:[#allocation3 + $0xd8] sm:$0xff]
    %v372 = vld [vmem:[#allocation3 + $0xe0] sm:$0xff]
    %v373 = vld [vmem:[#allocation3 + $0xe8] sm:$0xff]
    %v374 = vld [vmem:[#allocation3 + $0xf0] sm:$0xff]
    %v375 = vld [vmem:[#allocation3 + $0xf8] sm:$0xff]
    %v376 = vld [vmem:[#allocation3 + $0x100] sm:$0xff]
    %v377 = vld [vmem:[#allocation3 + $0x108] sm:$0xff]
    %v378 = vld [vmem:[#allocation3 + $0x110] sm:$0xff]
    %v379 = vld [vmem:[#allocation3 + $0x118] sm:$0xff]
    %v380 = vld [vmem:[#allocation3 + $0x120] sm:$0xff]
    %v381 = vld [vmem:[#allocation3 + $0x128] sm:$0xff]
    %v382 = vld [vmem:[#allocation3 + $0x130] sm:$0xff]
    %v383 = vld [vmem:[#allocation3 + $0x138] sm:$0xff]
    %v384 = vld [vmem:[#allocation3 + $0x140] sm:$0xff]
    %v385 = vld [vmem:[#allocation3 + $0x148] sm:$0xff]
    %v386 = vld [vmem:[#allocation3 + $0x150] sm:$0xff]
    %v387 = vld [vmem:[#allocation3 + $0x158] sm:$0xff]
    %v388 = vld [vmem:[#allocation3 + $0x160] sm:$0xff]
    %v389 = vld [vmem:[#allocation3 + $0x168] sm:$0xff]
    %v390 = vld [vmem:[#allocation3 + $0x170] sm:$0xff]
    %v391 = vld [vmem:[#allocation3 + $0x178] sm:$0xff]
    %v392 = vld [vmem:[#allocation3 + $0x180] sm:$0xff]
    %v393 = vld [vmem:[#allocation3 + $0x188] sm:$0xff]
    %v394 = vld [vmem:[#allocation3 + $0x190] sm:$0xff]
    %v395 = vld [vmem:[#allocation3 + $0x198] sm:$0xff]
    %v396 = vld [vmem:[#allocation3 + $0x1a0] sm:$0xff]
    %v397 = vld [vmem:[#allocation3 + $0x1a8] sm:$0xff]
    %v398 = vld [vmem:[#allocation3 + $0x1b0] sm:$0xff]
    %v399 = vld [vmem:[#allocation3 + $0x1b8] sm:$0xff]
    %v400 = vld [vmem:[#allocation3 + $0x1c0] sm:$0xff]
    %v401 = vld [vmem:[#allocation3 + $0x1c8] sm:$0xff]
    %v402 = vld [vmem:[#allocation3 + $0x1d0] sm:$0xff]
    %v403 = vld [vmem:[#allocation3 + $0x1d8] sm:$0xff]
    %v404 = vld [vmem:[#allocation3 + $0x1e0] sm:$0xff]
    %v405 = vld [vmem:[#allocation3 + $0x1e8] sm:$0xff]
    %v406 = vld [vmem:[#allocation3 + $0x1f0] sm:$0xff]
    %v407 = vld [vmem:[#allocation3 + $0x1f8] sm:$0xff]
    %v408 = vld [vmem:[#allocation3 + $0x200] sm:$0xff]
    %v409 = vld [vmem:[#allocation3 + $0x208] sm:$0xff]
    %v410 = vld [vmem:[#allocation3 + $0x210] sm:$0xff]
    %v411 = vld [vmem:[#allocation3 + $0x218] sm:$0xff]
    %v412 = vld [vmem:[#allocation3 + $0x220] sm:$0xff]
    %v413 = vld [vmem:[#allocation3 + $0x228] sm:$0xff]
    %v414 = vld [vmem:[#allocation3 + $0x230] sm:$0xff]
    %v415 = vld [vmem:[#allocation3 + $0x238] sm:$0xff]
    %v416 = vld [vmem:[#allocation3 + $0x240] sm:$0xff]
    %v417 = vld [vmem:[#allocation3 + $0x248] sm:$0xff]
    %v418 = vld [vmem:[#allocation3 + $0x250] sm:$0xff]
    %v419 = vld [vmem:[#allocation3 + $0x258] sm:$0xff]
    %v420 = vld [vmem:[#allocation3 + $0x260] sm:$0xff]
    %v421 = vld [vmem:[#allocation3 + $0x268] sm:$0xff]
    %v422 = vld [vmem:[#allocation3 + $0x270] sm:$0xff]
    %v423 = vld [vmem:[#allocation3 + $0x278] sm:$0xff]
    %v424 = vld [vmem:[#allocation3 + $0x280] sm:$0xff]
    %v425 = vld [vmem:[#allocation3 + $0x288] sm:$0xff]
    %v426 = vld [vmem:[#allocation3 + $0x290] sm:$0xff]
    %v427 = vld [vmem:[#allocation3 + $0x298] sm:$0xff]
    %v428 = vld [vmem:[#allocation3 + $0x2a0] sm:$0xff]
    %v429 = vld [vmem:[#allocation3 + $0x2a8] sm:$0xff]
    %v430 = vld [vmem:[#allocation3 + $0x2b0] sm:$0xff]
    %v431 = vld [vmem:[#allocation3 + $0x2b8] sm:$0xff]
    %v432 = vld [vmem:[#allocation3 + $0x2c0] sm:$0xff]
    %v433 = vld [vmem:[#allocation3 + $0x2c8] sm:$0xff]
    %v434 = vld [vmem:[#allocation3 + $0x2d0] sm:$0xff]
    %v435 = vld [vmem:[#allocation3 + $0x2d8] sm:$0xff]
    %v436 = vld [vmem:[#allocation3 + $0x2e0] sm:$0xff]
    %v437 = vld [vmem:[#allocation3 + $0x2e8] sm:$0xff]
    %v438 = vld [vmem:[#allocation3 + $0x2f0] sm:$0xff]
    %v439 = vld [vmem:[#allocation3 + $0x2f8] sm:$0xff]
    %v440 = vld [vmem:[#allocation3 + $0x300] sm:$0xff]
    %v441 = vld [vmem:[#allocation3 + $0x308] sm:$0xff]
    %v442 = vld [vmem:[#allocation3 + $0x310] sm:$0xff]
    %v443 = vld [vmem:[#allocation3 + $0x318] sm:$0xff]
    %v444 = vld [vmem:[#allocation3 + $0x320] sm:$0xff]
    %v445 = vld [vmem:[#allocation3 + $0x328] sm:$0xff]
    %v446 = vld [vmem:[#allocation3 + $0x330] sm:$0xff]
    %v447 = vld [vmem:[#allocation3 + $0x338] sm:$0xff]
    %v448 = vld [vmem:[#allocation3 + $0x340] sm:$0xff]
    %v449 = vld [vmem:[#allocation3 + $0x348] sm:$0xff]
    %v450 = vld [vmem:[#allocation3 + $0x350] sm:$0xff]
    %v451 = vld [vmem:[#allocation3 + $0x358] sm:$0xff]
    %v452 = vld [vmem:[#allocation3 + $0x360] sm:$0xff]
    %v453 = vld [vmem:[#allocation3 + $0x368] sm:$0xff]
    %v454 = vld [vmem:[#allocation3 + $0x370] sm:$0xff]
    %v455 = vld [vmem:[#allocation3 + $0x378] sm:$0xff]
    %v456 = vld [vmem:[#allocation3 + $0x380] sm:$0xff]
    %v457 = vld [vmem:[#allocation3 + $0x388] sm:$0xff]
    %v458 = vld [vmem:[#allocation3 + $0x390] sm:$0xff]
    %v459 = vld [vmem:[#allocation3 + $0x398] sm:$0xff]
    %v460 = vld [vmem:[#allocation3 + $0x3a0] sm:$0xff]
    %v461 = vld [vmem:[#allocation3 + $0x3a8] sm:$0xff]
    %v462 = vld [vmem:[#allocation3 + $0x3b0] sm:$0xff]
    %v463 = vld [vmem:[#allocation3 + $0x3b8] sm:$0xff]
    %v464 = vld [vmem:[#allocation3 + $0x3c0] sm:$0xff]
    %v465 = vld [vmem:[#allocation3 + $0x3c8] sm:$0xff]
    %v466 = vld [vmem:[#allocation3 + $0x3d0] sm:$0xff]
    %v467 = vld [vmem:[#allocation3 + $0x3d8] sm:$0xff]
    %v468 = vld [vmem:[#allocation3 + $0x3e0] sm:$0xff]
    %v469 = vld [vmem:[#allocation3 + $0x3e8] sm:$0xff]
    %v470 = vld [vmem:[#allocation3 + $0x3f0] sm:$0xff]
    %v471 = vld [vmem:[#allocation3 + $0x3f8] sm:$0xff]
    %v472 = vld [vmem:[#allocation3 + $0x400] sm:$0xff]
    %v473 = vld [vmem:[#allocation3 + $0x408] sm:$0xff]
    %v474 = vld [vmem:[#allocation3 + $0x410] sm:$0xff]
    %v475 = vld [vmem:[#allocation3 + $0x418] sm:$0xff]
    %v476 = vld [vmem:[#allocation3 + $0x420] sm:$0xff]
    %v477 = vld [vmem:[#allocation3 + $0x428] sm:$0xff]
    %v478 = vld [vmem:[#allocation3 + $0x430] sm:$0xff]
    %v479 = vld [vmem:[#allocation3 + $0x438] sm:$0xff]
    %v480 = vld [vmem:[#allocation3 + $0x440] sm:$0xff]
    %v481 = vld [vmem:[#allocation3 + $0x448] sm:$0xff]
    %v482 = vld [vmem:[#allocation3 + $0x450] sm:$0xff]
    %v483 = vld [vmem:[#allocation3 + $0x458] sm:$0xff]
    %v484 = vld [vmem:[#allocation3 + $0x460] sm:$0xff]
    %v485 = vld [vmem:[#allocation3 + $0x468] sm:$0xff]
    %v486 = vld [vmem:[#allocation3 + $0x470] sm:$0xff]
    %v487 = vld [vmem:[#allocation3 + $0x478] sm:$0xff]
    %v488 = vld [vmem:[#allocation3 + $0x480] sm:$0xff]
    %v489 = vld [vmem:[#allocation3 + $0x488] sm:$0xff]
    %v490 = vld [vmem:[#allocation3 + $0x490] sm:$0xff]
    %v491 = vld [vmem:[#allocation3 + $0x498] sm:$0xff]
    %v492 = vld [vmem:[#allocation3 + $0x4a0] sm:$0xff]
    %v493 = vld [vmem:[#allocation3 + $0x4a8] sm:$0xff]
    %v494 = vld [vmem:[#allocation3 + $0x4b0] sm:$0xff]
    %v495 = vld [vmem:[#allocation3 + $0x4b8] sm:$0xff]
    %v496 = vld [vmem:[#allocation3 + $0x4c0] sm:$0xff]
    %v497 = vld [vmem:[#allocation3 + $0x4c8] sm:$0xff]
    %v498 = vld [vmem:[#allocation3 + $0x4d0] sm:$0xff]
    %v499 = vld [vmem:[#allocation3 + $0x4d8] sm:$0xff]
    %v500 = vld [vmem:[#allocation3 + $0x4e0] sm:$0xff]
    %v501 = vld [vmem:[#allocation3 + $0x4e8] sm:$0xff]
    %v502 = vld [vmem:[#allocation3 + $0x4f0] sm:$0xff]
    %v503 = vld [vmem:[#allocation3 + $0x4f8] sm:$0xff]
    %v504 = vld [vmem:[#allocation3 + $0x500] sm:$0xff]
    %v505 = vld [vmem:[#allocation3 + $0x508] sm:$0xff]
    %v506 = vld [vmem:[#allocation3 + $0x510] sm:$0xff]
    %v507 = vld [vmem:[#allocation3 + $0x518] sm:$0xff]
    %v508 = vld [vmem:[#allocation3 + $0x520] sm:$0xff]
    %v509 = vld [vmem:[#allocation3 + $0x528] sm:$0xff]
    %v510 = vld [vmem:[#allocation3 + $0x530] sm:$0xff]
    %v511 = vld [vmem:[#allocation3 + $0x538] sm:$0xff]
    %v512 = vld [vmem:[#allocation3 + $0x540] sm:$0xff]
    %v513 = vld [vmem:[#allocation3 + $0x548] sm:$0xff]
    %v514 = vld [vmem:[#allocation3 + $0x550] sm:$0xff]
    %v515 = vld [vmem:[#allocation3 + $0x558] sm:$0xff]
    %v516 = vld [vmem:[#allocation3 + $0x560] sm:$0xff]
    %v517 = vld [vmem:[#allocation3 + $0x568] sm:$0xff]
    %v518 = vld [vmem:[#allocation3 + $0x570] sm:$0xff]
    %v519 = vld [vmem:[#allocation3 + $0x578] sm:$0xff]
    %v520 = vld [vmem:[#allocation3 + $0x580] sm:$0xff]
    %v521 = vld [vmem:[#allocation3 + $0x588] sm:$0xff]
    %v522 = vld [vmem:[#allocation3 + $0x590] sm:$0xff]
    %v523 = vld [vmem:[#allocation3 + $0x598] sm:$0xff]
    %v524 = vld [vmem:[#allocation3 + $0x5a0] sm:$0xff]
    %v525 = vld [vmem:[#allocation3 + $0x5a8] sm:$0xff]
    %v526 = vld [vmem:[#allocation3 + $0x5b0] sm:$0xff]
    %v527 = vld [vmem:[#allocation3 + $0x5b8] sm:$0xff]
    %v528 = vld [vmem:[#allocation3 + $0x5c0] sm:$0xff]
    %v529 = vld [vmem:[#allocation3 + $0x5c8] sm:$0xff]
    %v530 = vld [vmem:[#allocation3 + $0x5d0] sm:$0xff]
    %v531 = vld [vmem:[#allocation3 + $0x5d8] sm:$0xff]
    %v532 = vld [vmem:[#allocation3 + $0x5e0] sm:$0xff]
    %v533 = vld [vmem:[#allocation3 + $0x5e8] sm:$0xff]
    %v534 = vld [vmem:[#allocation3 + $0x5f0] sm:$0xff]
    %v535 = vld [vmem:[#allocation3 + $0x5f8] sm:$0xff]
    %v536 = vld [vmem:[#allocation3 + $0x600] sm:$0xff]
    %v537 = vld [vmem:[#allocation3 + $0x608] sm:$0xff]
    %v538 = vld [vmem:[#allocation3 + $0x610] sm:$0xff]
    %v539 = vld [vmem:[#allocation3 + $0x618] sm:$0xff]
    %v540 = vld [vmem:[#allocation3 + $0x620] sm:$0xff]
    %v541 = vld [vmem:[#allocation3 + $0x628] sm:$0xff]
    %v542 = vld [vmem:[#allocation3 + $0x630] sm:$0xff]
    %v543 = vld [vmem:[#allocation3 + $0x638] sm:$0xff]
    %v544 = vld [vmem:[#allocation3 + $0x640] sm:$0xff]
    %v545 = vld [vmem:[#allocation3 + $0x648] sm:$0xff]
    %v546 = vld [vmem:[#allocation3 + $0x650] sm:$0xff]
    %v547 = vld [vmem:[#allocation3 + $0x658] sm:$0xff]
    %v548 = vld [vmem:[#allocation3 + $0x660] sm:$0xff]
    %v549 = vld [vmem:[#allocation3 + $0x668] sm:$0xff]
    %v550 = vld [vmem:[#allocation3 + $0x670] sm:$0xff]
    %v551 = vld [vmem:[#allocation3 + $0x678] sm:$0xff]
    %v552 = vld [vmem:[#allocation3 + $0x680] sm:$0xff]
    %v553 = vld [vmem:[#allocation3 + $0x688] sm:$0xff]
    %v554 = vld [vmem:[#allocation3 + $0x690] sm:$0xff]
    %v555 = vld [vmem:[#allocation3 + $0x698] sm:$0xff]
    %v556 = vld [vmem:[#allocation3 + $0x6a0] sm:$0xff]
    %v557 = vld [vmem:[#allocation3 + $0x6a8] sm:$0xff]
    %v558 = vld [vmem:[#allocation3 + $0x6b0] sm:$0xff]
    %v559 = vld [vmem:[#allocation3 + $0x6b8] sm:$0xff]
    %v560 = vld [vmem:[#allocation3 + $0x6c0] sm:$0xff]
    %v561 = vld [vmem:[#allocation3 + $0x6c8] sm:$0xff]
    %v562 = vld [vmem:[#allocation3 + $0x6d0] sm:$0xff]
    %v563 = vld [vmem:[#allocation3 + $0x6d8] sm:$0xff]
    %v564 = vld [vmem:[#allocation3 + $0x6e0] sm:$0xff]
    %v565 = vld [vmem:[#allocation3 + $0x6e8] sm:$0xff]
    %v566 = vld [vmem:[#allocation3 + $0x6f0] sm:$0xff]
    %v567 = vld [vmem:[#allocation3 + $0x6f8] sm:$0xff]
    %v568 = vld [vmem:[#allocation3 + $0x700] sm:$0xff]
    %v569 = vld [vmem:[#allocation3 + $0x708] sm:$0xff]
    %v570 = vld [vmem:[#allocation3 + $0x710] sm:$0xff]
    %v571 = vld [vmem:[#allocation3 + $0x718] sm:$0xff]
    %v572 = vld [vmem:[#allocation3 + $0x720] sm:$0xff]
    %v573 = vld [vmem:[#allocation3 + $0x728] sm:$0xff]
    %v574 = vld [vmem:[#allocation3 + $0x730] sm:$0xff]
    %v575 = vld [vmem:[#allocation3 + $0x738] sm:$0xff]
    %v576 = vld [vmem:[#allocation3 + $0x740] sm:$0xff]
    %v577 = vld [vmem:[#allocation3 + $0x748] sm:$0xff]
    %v578 = vld [vmem:[#allocation3 + $0x750] sm:$0xff]
    %v579 = vld [vmem:[#allocation3 + $0x758] sm:$0xff]
    %v580 = vld [vmem:[#allocation3 + $0x760] sm:$0xff]
    %v581 = vld [vmem:[#allocation3 + $0x768] sm:$0xff]
    %v582 = vld [vmem:[#allocation3 + $0x770] sm:$0xff]
    %v583 = vld [vmem:[#allocation3 + $0x778] sm:$0xff]
    %v584 = vld [vmem:[#allocation3 + $0x780] sm:$0xff]
    %v585 = vld [vmem:[#allocation3 + $0x788] sm:$0xff]
    %v586 = vld [vmem:[#allocation3 + $0x790] sm:$0xff]
    %v587 = vld [vmem:[#allocation3 + $0x798] sm:$0xff]
    %v588 = vld [vmem:[#allocation3 + $0x7a0] sm:$0xff]
    %v589 = vld [vmem:[#allocation3 + $0x7a8] sm:$0xff]
    %v590 = vld [vmem:[#allocation3 + $0x7b0] sm:$0xff]
    %v591 = vld [vmem:[#allocation3 + $0x7b8] sm:$0xff]
    %v592 = vld [vmem:[#allocation3 + $0x7c0] sm:$0xff]
    %v593 = vld [vmem:[#allocation3 + $0x7c8] sm:$0xff]
    %v594 = vld [vmem:[#allocation3 + $0x7d0] sm:$0xff]
    %v595 = vld [vmem:[#allocation3 + $0x7d8] sm:$0xff]
    %v596 = vld [vmem:[#allocation3 + $0x7e0] sm:$0xff]
    %v597 = vld [vmem:[#allocation3 + $0x7e8] sm:$0xff]
    %v598 = vld [vmem:[#allocation3 + $0x7f0] sm:$0xff]
    %v599 = vld [vmem:[#allocation3 + $0x7f8] sm:$0xff]
    %v600 = vld [vmem:[%s4] sm:$0xf]
    %v602 = vlaneseq
    %v603 = vshrl.u32 %v602, 7
    %v604 = vsub.s32 0, %v603
    %v605 = vrot.slane %v600, %v604
    %v606 = vlaneseq
    %v607 = vshrl.u32 %v606, 7
    %v608 = vsub.s32 1, %v607
    %v609 = vrot.slane %v600, %v608
    %v610 = vlaneseq
    %v611 = vshrl.u32 %v610, 7
    %v612 = vsub.s32 2, %v611
    %v613 = vrot.slane %v600, %v612
    %v614 = vlaneseq
    %v615 = vshrl.u32 %v614, 7
    %v616 = vsub.s32 3, %v615
    %v617 = vrot.slane %v600, %v616
    %622 = vmatprep.subr.mxu0 %v345
    %623 = vmatpush1.msra.mxu0 %v344
    %624 = vmatprep.subr.mxu0 %v349
    %625 = vmatpush1.msra.mxu0 %v348
    %626 = vmatprep.subr.mxu0 %v353
    %627 = vmatpush1.msra.mxu0 %v352
    %628 = vmatprep.subr.mxu0 %v357
    %629 = vmatpush1.msra.mxu0 %v356
    %630 = vmatprep.subr.mxu0 %v361
    %631 = vmatpush1.msra.mxu0 %v360
    %632 = vmatprep.subr.mxu0 %v365
    %633 = vmatpush1.msra.mxu0 %v364
    %634 = vmatprep.subr.mxu0 %v369
    %635 = vmatpush1.msra.mxu0 %v368
    %636 = vmatprep.subr.mxu0 %v373
    %637 = vmatpush1.msra.mxu0 %v372
    %638 = vmatprep.subr.mxu0 %v377
    %639 = vmatpush1.msra.mxu0 %v376
    %640 = vmatprep.subr.mxu0 %v381
    %641 = vmatpush1.msra.mxu0 %v380
    %642 = vmatprep.subr.mxu0 %v385
    %643 = vmatpush1.msra.mxu0 %v384
    %644 = vmatprep.subr.mxu0 %v389
    %645 = vmatpush1.msra.mxu0 %v388
    %646 = vmatprep.subr.mxu0 %v393
    %647 = vmatpush1.msra.mxu0 %v392
    %648 = vmatprep.subr.mxu0 %v397
    %649 = vmatpush1.msra.mxu0 %v396
    %650 = vmatprep.subr.mxu0 %v401
    %651 = vmatpush1.msra.mxu0 %v400
    %652 = vmatprep.subr.mxu0 %v405
    %653 = vmatpush1.msra.mxu0 %v404
    %654 = vmatprep.subr.mxu0 %v409
    %655 = vmatpush1.msra.mxu0 %v408
    %656 = vmatprep.subr.mxu0 %v413
    %657 = vmatpush1.msra.mxu0 %v412
    %658 = vmatprep.subr.mxu0 %v417
    %659 = vmatpush1.msra.mxu0 %v416
    %660 = vmatprep.subr.mxu0 %v421
    %661 = vmatpush1.msra.mxu0 %v420
    %662 = vmatprep.subr.mxu0 %v425
    %663 = vmatpush1.msra.mxu0 %v424
    %664 = vmatprep.subr.mxu0 %v429
    %665 = vmatpush1.msra.mxu0 %v428
    %666 = vmatprep.subr.mxu0 %v433
    %667 = vmatpush1.msra.mxu0 %v432
    %668 = vmatprep.subr.mxu0 %v437
    %669 = vmatpush1.msra.mxu0 %v436
    %670 = vmatprep.subr.mxu0 %v441
    %671 = vmatpush1.msra.mxu0 %v440
    %672 = vmatprep.subr.mxu0 %v445
    %673 = vmatpush1.msra.mxu0 %v444
    %674 = vmatprep.subr.mxu0 %v449
    %675 = vmatpush1.msra.mxu0 %v448
    %676 = vmatprep.subr.mxu0 %v453
    %677 = vmatpush1.msra.mxu0 %v452
    %678 = vmatprep.subr.mxu0 %v457
    %679 = vmatpush1.msra.mxu0 %v456
    %680 = vmatprep.subr.mxu0 %v461
    %681 = vmatpush1.msra.mxu0 %v460
    %682 = vmatprep.subr.mxu0 %v465
    %683 = vmatpush1.msra.mxu0 %v464
    %684 = vmatprep.subr.mxu0 %v469
    %685 = vmatpush1.msra.mxu0 %v468
    %686 = vmatprep.mubr.f32.mxu0 %v337
    %687 = vmatmul.mubr.f32.gmra.mrb[0].mxu0 %v336
    %v688 = vpop.f32.mrb[0].mxu0
    %v689 = vadd.f32 %v605, %v688
    %v690 = vpop.f32.mrb[0].mxu0
    %v691 = vadd.f32 %v609, %v690
    %692 = vmatprep.mubr.f32.mxu0 %v341
    %693 = vmatmul.mubr.f32.gmra.mrb[0].mxu0 %v340
    %v694 = vpop.f32.mrb[0].mxu0
    %v695 = vadd.f32 %v605, %v694
    %v696 = vpop.f32.mrb[0].mxu0
    %v697 = vadd.f32 %v609, %v696
    %698 = vdwg.mxu0
    %699 = vmatprep.subr.mxu0 %v473
    %700 = vmatpush1.msra.mxu0 %v472
    %701 = vmatprep.subr.mxu0 %v477
    %702 = vmatpush1.msra.mxu0 %v476
    %703 = vmatprep.subr.mxu0 %v481
    %704 = vmatpush1.msra.mxu0 %v480
    %705 = vmatprep.subr.mxu0 %v485
    %706 = vmatpush1.msra.mxu0 %v484
    %707 = vmatprep.subr.mxu0 %v489
    %708 = vmatpush1.msra.mxu0 %v488
    %709 = vmatprep.subr.mxu0 %v493
    %710 = vmatpush1.msra.mxu0 %v492
    %711 = vmatprep.subr.mxu0 %v497
    %712 = vmatpush1.msra.mxu0 %v496
    %713 = vmatprep.subr.mxu0 %v501
    %714 = vmatpush1.msra.mxu0 %v500
    %715 = vmatprep.subr.mxu0 %v505
    %716 = vmatpush1.msra.mxu0 %v504
    %717 = vmatprep.subr.mxu0 %v509
    %718 = vmatpush1.msra.mxu0 %v508
    %719 = vmatprep.subr.mxu0 %v513
    %720 = vmatpush1.msra.mxu0 %v512
    %721 = vmatprep.subr.mxu0 %v517
    %722 = vmatpush1.msra.mxu0 %v516
    %723 = vmatprep.subr.mxu0 %v521
    %724 = vmatpush1.msra.mxu0 %v520
    %725 = vmatprep.subr.mxu0 %v525
    %726 = vmatpush1.msra.mxu0 %v524
    %727 = vmatprep.subr.mxu0 %v529
    %728 = vmatpush1.msra.mxu0 %v528
    %729 = vmatprep.subr.mxu0 %v533
    %730 = vmatpush1.msra.mxu0 %v532
    %731 = vmatprep.subr.mxu0 %v537
    %732 = vmatpush1.msra.mxu0 %v536
    %733 = vmatprep.subr.mxu0 %v541
    %734 = vmatpush1.msra.mxu0 %v540
    %735 = vmatprep.subr.mxu0 %v545
    %736 = vmatpush1.msra.mxu0 %v544
    %737 = vmatprep.subr.mxu0 %v549
    %738 = vmatpush1.msra.mxu0 %v548
    %739 = vmatprep.subr.mxu0 %v553
    %740 = vmatpush1.msra.mxu0 %v552
    %741 = vmatprep.subr.mxu0 %v557
    %742 = vmatpush1.msra.mxu0 %v556
    %743 = vmatprep.subr.mxu0 %v561
    %744 = vmatpush1.msra.mxu0 %v560
    %745 = vmatprep.subr.mxu0 %v565
    %746 = vmatpush1.msra.mxu0 %v564
    %747 = vmatprep.subr.mxu0 %v569
    %748 = vmatpush1.msra.mxu0 %v568
    %749 = vmatprep.subr.mxu0 %v573
    %750 = vmatpush1.msra.mxu0 %v572
    %751 = vmatprep.subr.mxu0 %v577
    %752 = vmatpush1.msra.mxu0 %v576
    %753 = vmatprep.subr.mxu0 %v581
    %754 = vmatpush1.msra.mxu0 %v580
    %755 = vmatprep.subr.mxu0 %v585
    %756 = vmatpush1.msra.mxu0 %v584
    %757 = vmatprep.subr.mxu0 %v589
    %758 = vmatpush1.msra.mxu0 %v588
    %759 = vmatprep.subr.mxu0 %v593
    %760 = vmatpush1.msra.mxu0 %v592
    %761 = vmatprep.subr.mxu0 %v597
    %762 = vmatpush1.msra.mxu0 %v596
    %763 = vmatprep.mubr.f32.mxu0 %v339
    %764 = vmatmul.mubr.f32.gmra.mrb[0].mxu0 %v338
    %v765 = vpop.f32.mrb[0].mxu0
    %v766 = vadd.f32 %v689, %v765
    %v767 = vpop.f32.mrb[0].mxu0
    %v768 = vadd.f32 %v691, %v767
    %769 = vmatprep.mubr.f32.mxu0 %v343
    %770 = vmatmul.mubr.f32.gmra.mrb[0].mxu0 %v342
    %v771 = vpop.f32.mrb[0].mxu0
    %v772 = vadd.f32 %v695, %v771
    %v773 = vpop.f32.mrb[0].mxu0
    %v774 = vadd.f32 %v697, %v773
    %775 = vdwg.mxu0
    %776 = vmatprep.subr.mxu0 %v347
    %777 = vmatpush1.msra.mxu0 %v346
    %778 = vmatprep.subr.mxu0 %v351
    %779 = vmatpush1.msra.mxu0 %v350
    %780 = vmatprep.subr.mxu0 %v355
    %781 = vmatpush1.msra.mxu0 %v354
    %782 = vmatprep.subr.mxu0 %v359
    %783 = vmatpush1.msra.mxu0 %v358
    %784 = vmatprep.subr.mxu0 %v363
    %785 = vmatpush1.msra.mxu0 %v362
    %786 = vmatprep.subr.mxu0 %v367
    %787 = vmatpush1.msra.mxu0 %v366
    %788 = vmatprep.subr.mxu0 %v371
    %789 = vmatpush1.msra.mxu0 %v370
    %790 = vmatprep.subr.mxu0 %v375
    %791 = vmatpush1.msra.mxu0 %v374
    %792 = vmatprep.subr.mxu0 %v379
    %793 = vmatpush1.msra.mxu0 %v378
    %794 = vmatprep.subr.mxu0 %v383
    %795 = vmatpush1.msra.mxu0 %v382
    %796 = vmatprep.subr.mxu0 %v387
    %797 = vmatpush1.msra.mxu0 %v386
    %798 = vmatprep.subr.mxu0 %v391
    %799 = vmatpush1.msra.mxu0 %v390
    %800 = vmatprep.subr.mxu0 %v395
    %801 = vmatpush1.msra.mxu0 %v394
    %802 = vmatprep.subr.mxu0 %v399
    %803 = vmatpush1.msra.mxu0 %v398
    %804 = vmatprep.subr.mxu0 %v403
    %805 = vmatpush1.msra.mxu0 %v402
    %806 = vmatprep.subr.mxu0 %v407
    %807 = vmatpush1.msra.mxu0 %v406
    %808 = vmatprep.subr.mxu0 %v411
    %809 = vmatpush1.msra.mxu0 %v410
    %810 = vmatprep.subr.mxu0 %v415
    %811 = vmatpush1.msra.mxu0 %v414
    %812 = vmatprep.subr.mxu0 %v419
    %813 = vmatpush1.msra.mxu0 %v418
    %814 = vmatprep.subr.mxu0 %v423
    %815 = vmatpush1.msra.mxu0 %v422
    %816 = vmatprep.subr.mxu0 %v427
    %817 = vmatpush1.msra.mxu0 %v426
    %818 = vmatprep.subr.mxu0 %v431
    %819 = vmatpush1.msra.mxu0 %v430
    %820 = vmatprep.subr.mxu0 %v435
    %821 = vmatpush1.msra.mxu0 %v434
    %822 = vmatprep.subr.mxu0 %v439
    %823 = vmatpush1.msra.mxu0 %v438
    %824 = vmatprep.subr.mxu0 %v443
    %825 = vmatpush1.msra.mxu0 %v442
    %826 = vmatprep.subr.mxu0 %v447
    %827 = vmatpush1.msra.mxu0 %v446
    %828 = vmatprep.subr.mxu0 %v451
    %829 = vmatpush1.msra.mxu0 %v450
    %830 = vmatprep.subr.mxu0 %v455
    %831 = vmatpush1.msra.mxu0 %v454
    %832 = vmatprep.subr.mxu0 %v459
    %833 = vmatpush1.msra.mxu0 %v458
    %834 = vmatprep.subr.mxu0 %v463
    %835 = vmatpush1.msra.mxu0 %v462
    %836 = vmatprep.subr.mxu0 %v467
    %837 = vmatpush1.msra.mxu0 %v466
    %838 = vmatprep.subr.mxu0 %v471
    %839 = vmatpush1.msra.mxu0 %v470
    %840 = vmatprep.mubr.f32.mxu0 %v337
    %841 = vmatmul.mubr.f32.gmra.mrb[0].mxu0 %v336
    %v842 = vpop.f32.mrb[0].mxu0
    %v843 = vadd.f32 %v613, %v842
    %v844 = vpop.f32.mrb[0].mxu0
    %v845 = vadd.f32 %v617, %v844
    %846 = vmatprep.mubr.f32.mxu0 %v341
    %847 = vmatmul.mubr.f32.gmra.mrb[0].mxu0 %v340
    %v848 = vpop.f32.mrb[0].mxu0
    %v849 = vadd.f32 %v613, %v848
    %v850 = vpop.f32.mrb[0].mxu0
    %v851 = vadd.f32 %v617, %v850
    %852 = vdwg.mxu0
    %853 = vmatprep.subr.mxu0 %v475
    %854 = vmatpush1.msra.mxu0 %v474
    %855 = vmatprep.subr.mxu0 %v479
    %856 = vmatpush1.msra.mxu0 %v478
    %857 = vmatprep.subr.mxu0 %v483
    %858 = vmatpush1.msra.mxu0 %v482
    %859 = vmatprep.subr.mxu0 %v487
    %860 = vmatpush1.msra.mxu0 %v486
    %861 = vmatprep.subr.mxu0 %v491
    %862 = vmatpush1.msra.mxu0 %v490
    %863 = vmatprep.subr.mxu0 %v495
    %864 = vmatpush1.msra.mxu0 %v494
    %865 = vmatprep.subr.mxu0 %v499
    %866 = vmatpush1.msra.mxu0 %v498
    %867 = vmatprep.subr.mxu0 %v503
    %868 = vmatpush1.msra.mxu0 %v502
    %869 = vmatprep.subr.mxu0 %v507
    %870 = vmatpush1.msra.mxu0 %v506
    %871 = vmatprep.subr.mxu0 %v511
    %872 = vmatpush1.msra.mxu0 %v510
    %873 = vmatprep.subr.mxu0 %v515
    %874 = vmatpush1.msra.mxu0 %v514
    %875 = vmatprep.subr.mxu0 %v519
    %876 = vmatpush1.msra.mxu0 %v518
    %877 = vmatprep.subr.mxu0 %v523
    %878 = vmatpush1.msra.mxu0 %v522
    %879 = vmatprep.subr.mxu0 %v527
    %880 = vmatpush1.msra.mxu0 %v526
    %881 = vmatprep.subr.mxu0 %v531
    %882 = vmatpush1.msra.mxu0 %v530
    %883 = vmatprep.subr.mxu0 %v535
    %884 = vmatpush1.msra.mxu0 %v534
    %885 = vmatprep.subr.mxu0 %v539
    %886 = vmatpush1.msra.mxu0 %v538
    %887 = vmatprep.subr.mxu0 %v543
    %888 = vmatpush1.msra.mxu0 %v542
    %889 = vmatprep.subr.mxu0 %v547
    %890 = vmatpush1.msra.mxu0 %v546
    %891 = vmatprep.subr.mxu0 %v551
    %892 = vmatpush1.msra.mxu0 %v550
    %893 = vmatprep.subr.mxu0 %v555
    %894 = vmatpush1.msra.mxu0 %v554
    %895 = vmatprep.subr.mxu0 %v559
    %896 = vmatpush1.msra.mxu0 %v558
    %897 = vmatprep.subr.mxu0 %v563
    %898 = vmatpush1.msra.mxu0 %v562
    %899 = vmatprep.subr.mxu0 %v567
    %900 = vmatpush1.msra.mxu0 %v566
    %901 = vmatprep.subr.mxu0 %v571
    %902 = vmatpush1.msra.mxu0 %v570
    %903 = vmatprep.subr.mxu0 %v575
    %904 = vmatpush1.msra.mxu0 %v574
    %905 = vmatprep.subr.mxu0 %v579
    %906 = vmatpush1.msra.mxu0 %v578
    %907 = vmatprep.subr.mxu0 %v583
    %908 = vmatpush1.msra.mxu0 %v582
    %909 = vmatprep.subr.mxu0 %v587
    %910 = vmatpush1.msra.mxu0 %v586
    %911 = vmatprep.subr.mxu0 %v591
    %912 = vmatpush1.msra.mxu0 %v590
    %913 = vmatprep.subr.mxu0 %v595
    %914 = vmatpush1.msra.mxu0 %v594
    %915 = vmatprep.subr.mxu0 %v599
    %916 = vmatpush1.msra.mxu0 %v598
    %917 = vmatprep.mubr.f32.mxu0 %v339
    %918 = vmatmul.mubr.f32.gmra.mrb[0].mxu0 %v338
    %v919 = vpop.f32.mrb[0].mxu0
    %v920 = vadd.f32 %v843, %v919
    %v921 = vpop.f32.mrb[0].mxu0
    %v922 = vadd.f32 %v845, %v921
    %923 = vmatprep.mubr.f32.mxu0 %v343
    %924 = vmatmul.mubr.f32.gmra.mrb[0].mxu0 %v342
    %v925 = vpop.f32.mrb[0].mxu0
    %v926 = vadd.f32 %v849, %v925
    %v927 = vpop.f32.mrb[0].mxu0
    %v928 = vadd.f32 %v851, %v927
    %929 = vdwg.mxu0
    %v930 = vmul.f32 %v766, 0.2
    %v931 = vmul.f32 %v768, 0.2
    %v932 = vmul.f32 %v920, 0.2
    %v933 = vmul.f32 %v922, 0.2
    %v934 = vmul.f32 %v772, 0.2
    %v935 = vmul.f32 %v774, 0.2
    %v936 = vmul.f32 %v926, 0.2
    %v937 = vmul.f32 %v928, 0.2
    %v938 = vmax.f32 %v766, %v930
    %v939 = vmax.f32 %v768, %v931
    %v940 = vmax.f32 %v920, %v932
    %v941 = vmax.f32 %v922, %v933
    %v942 = vmax.f32 %v772, %v934
    %v943 = vmax.f32 %v774, %v935
    %v944 = vmax.f32 %v926, %v936
    %v945 = vmax.f32 %v928, %v937
    %v946 = vld [vmem:[#allocation5] sm:$0xff]
    %v947 = vld [vmem:[#allocation5 + $0x8] sm:$0xff]
    %v948 = vld [vmem:[#allocation5 + $0x10] sm:$0xff]
    %v949 = vld [vmem:[#allocation5 + $0x18] sm:$0xff]
    %v950 = vld [vmem:[#allocation5 + $0x20] sm:$0xff]
    %v951 = vld [vmem:[#allocation5 + $0x28] sm:$0xff]
    %v952 = vld [vmem:[#allocation5 + $0x30] sm:$0xff]
    %v953 = vld [vmem:[#allocation5 + $0x38] sm:$0xff]
    %v954 = vld [vmem:[#allocation5 + $0x40] sm:$0xff]
    %v955 = vld [vmem:[#allocation5 + $0x48] sm:$0xff]
    %v956 = vld [vmem:[#allocation5 + $0x50] sm:$0xff]
    %v957 = vld [vmem:[#allocation5 + $0x58] sm:$0xff]
    %v958 = vld [vmem:[#allocation5 + $0x60] sm:$0xff]
    %v959 = vld [vmem:[#allocation5 + $0x68] sm:$0xff]
    %v960 = vld [vmem:[#allocation5 + $0x70] sm:$0xff]
    %v961 = vld [vmem:[#allocation5 + $0x78] sm:$0xff]
    %v962 = vld [vmem:[#allocation5 + $0x80] sm:$0xff]
    %v963 = vld [vmem:[#allocation5 + $0x88] sm:$0xff]
    %v964 = vld [vmem:[#allocation5 + $0x90] sm:$0xff]
    %v965 = vld [vmem:[#allocation5 + $0x98] sm:$0xff]
    %v966 = vld [vmem:[#allocation5 + $0xa0] sm:$0xff]
    %v967 = vld [vmem:[#allocation5 + $0xa8] sm:$0xff]
    %v968 = vld [vmem:[#allocation5 + $0xb0] sm:$0xff]
    %v969 = vld [vmem:[#allocation5 + $0xb8] sm:$0xff]
    %v970 = vld [vmem:[#allocation5 + $0xc0] sm:$0xff]
    %v971 = vld [vmem:[#allocation5 + $0xc8] sm:$0xff]
    %v972 = vld [vmem:[#allocation5 + $0xd0] sm:$0xff]
    %v973 = vld [vmem:[#allocation5 + $0xd8] sm:$0xff]
    %v974 = vld [vmem:[#allocation5 + $0xe0] sm:$0xff]
    %v975 = vld [vmem:[#allocation5 + $0xe8] sm:$0xff]
    %v976 = vld [vmem:[#allocation5 + $0xf0] sm:$0xff]
    %v977 = vld [vmem:[#allocation5 + $0xf8] sm:$0xff]
    %v978 = vld [vmem:[#allocation5 + $0x100] sm:$0xff]
    %v979 = vld [vmem:[#allocation5 + $0x108] sm:$0xff]
    %v980 = vld [vmem:[#allocation5 + $0x110] sm:$0xff]
    %v981 = vld [vmem:[#allocation5 + $0x118] sm:$0xff]
    %v982 = vld [vmem:[#allocation5 + $0x120] sm:$0xff]
    %v983 = vld [vmem:[#allocation5 + $0x128] sm:$0xff]
    %v984 = vld [vmem:[#allocation5 + $0x130] sm:$0xff]
    %v985 = vld [vmem:[#allocation5 + $0x138] sm:$0xff]
    %v986 = vld [vmem:[#allocation5 + $0x140] sm:$0xff]
    %v987 = vld [vmem:[#allocation5 + $0x148] sm:$0xff]
    %v988 = vld [vmem:[#allocation5 + $0x150] sm:$0xff]
    %v989 = vld [vmem:[#allocation5 + $0x158] sm:$0xff]
    %v990 = vld [vmem:[#allocation5 + $0x160] sm:$0xff]
    %v991 = vld [vmem:[#allocation5 + $0x168] sm:$0xff]
    %v992 = vld [vmem:[#allocation5 + $0x170] sm:$0xff]
    %v993 = vld [vmem:[#allocation5 + $0x178] sm:$0xff]
    %v994 = vld [vmem:[#allocation5 + $0x180] sm:$0xff]
    %v995 = vld [vmem:[#allocation5 + $0x188] sm:$0xff]
    %v996 = vld [vmem:[#allocation5 + $0x190] sm:$0xff]
    %v997 = vld [vmem:[#allocation5 + $0x198] sm:$0xff]
    %v998 = vld [vmem:[#allocation5 + $0x1a0] sm:$0xff]
    %v999 = vld [vmem:[#allocation5 + $0x1a8] sm:$0xff]
    %v1000 = vld [vmem:[#allocation5 + $0x1b0] sm:$0xff]
    %v1001 = vld [vmem:[#allocation5 + $0x1b8] sm:$0xff]
    %v1002 = vld [vmem:[#allocation5 + $0x1c0] sm:$0xff]
    %v1003 = vld [vmem:[#allocation5 + $0x1c8] sm:$0xff]
    %v1004 = vld [vmem:[#allocation5 + $0x1d0] sm:$0xff]
    %v1005 = vld [vmem:[#allocation5 + $0x1d8] sm:$0xff]
    %v1006 = vld [vmem:[#allocation5 + $0x1e0] sm:$0xff]
    %v1007 = vld [vmem:[#allocation5 + $0x1e8] sm:$0xff]
    %v1008 = vld [vmem:[#allocation5 + $0x1f0] sm:$0xff]
    %v1009 = vld [vmem:[#allocation5 + $0x1f8] sm:$0xff]
    %v1010 = vld [vmem:[#allocation5 + $0x200] sm:$0xff]
    %v1011 = vld [vmem:[#allocation5 + $0x208] sm:$0xff]
    %v1012 = vld [vmem:[#allocation5 + $0x210] sm:$0xff]
    %v1013 = vld [vmem:[#allocation5 + $0x218] sm:$0xff]
    %v1014 = vld [vmem:[#allocation5 + $0x220] sm:$0xff]
    %v1015 = vld [vmem:[#allocation5 + $0x228] sm:$0xff]
    %v1016 = vld [vmem:[#allocation5 + $0x230] sm:$0xff]
    %v1017 = vld [vmem:[#allocation5 + $0x238] sm:$0xff]
    %v1018 = vld [vmem:[#allocation5 + $0x240] sm:$0xff]
    %v1019 = vld [vmem:[#allocation5 + $0x248] sm:$0xff]
    %v1020 = vld [vmem:[#allocation5 + $0x250] sm:$0xff]
    %v1021 = vld [vmem:[#allocation5 + $0x258] sm:$0xff]
    %v1022 = vld [vmem:[#allocation5 + $0x260] sm:$0xff]
    %v1023 = vld [vmem:[#allocation5 + $0x268] sm:$0xff]
    %v1024 = vld [vmem:[#allocation5 + $0x270] sm:$0xff]
    %v1025 = vld [vmem:[#allocation5 + $0x278] sm:$0xff]
    %v1026 = vld [vmem:[#allocation5 + $0x280] sm:$0xff]
    %v1027 = vld [vmem:[#allocation5 + $0x288] sm:$0xff]
    %v1028 = vld [vmem:[#allocation5 + $0x290] sm:$0xff]
    %v1029 = vld [vmem:[#allocation5 + $0x298] sm:$0xff]
    %v1030 = vld [vmem:[#allocation5 + $0x2a0] sm:$0xff]
    %v1031 = vld [vmem:[#allocation5 + $0x2a8] sm:$0xff]
    %v1032 = vld [vmem:[#allocation5 + $0x2b0] sm:$0xff]
    %v1033 = vld [vmem:[#allocation5 + $0x2b8] sm:$0xff]
    %v1034 = vld [vmem:[#allocation5 + $0x2c0] sm:$0xff]
    %v1035 = vld [vmem:[#allocation5 + $0x2c8] sm:$0xff]
    %v1036 = vld [vmem:[#allocation5 + $0x2d0] sm:$0xff]
    %v1037 = vld [vmem:[#allocation5 + $0x2d8] sm:$0xff]
    %v1038 = vld [vmem:[#allocation5 + $0x2e0] sm:$0xff]
    %v1039 = vld [vmem:[#allocation5 + $0x2e8] sm:$0xff]
    %v1040 = vld [vmem:[#allocation5 + $0x2f0] sm:$0xff]
    %v1041 = vld [vmem:[#allocation5 + $0x2f8] sm:$0xff]
    %v1042 = vld [vmem:[#allocation5 + $0x300] sm:$0xff]
    %v1043 = vld [vmem:[#allocation5 + $0x308] sm:$0xff]
    %v1044 = vld [vmem:[#allocation5 + $0x310] sm:$0xff]
    %v1045 = vld [vmem:[#allocation5 + $0x318] sm:$0xff]
    %v1046 = vld [vmem:[#allocation5 + $0x320] sm:$0xff]
    %v1047 = vld [vmem:[#allocation5 + $0x328] sm:$0xff]
    %v1048 = vld [vmem:[#allocation5 + $0x330] sm:$0xff]
    %v1049 = vld [vmem:[#allocation5 + $0x338] sm:$0xff]
    %v1050 = vld [vmem:[#allocation5 + $0x340] sm:$0xff]
    %v1051 = vld [vmem:[#allocation5 + $0x348] sm:$0xff]
    %v1052 = vld [vmem:[#allocation5 + $0x350] sm:$0xff]
    %v1053 = vld [vmem:[#allocation5 + $0x358] sm:$0xff]
    %v1054 = vld [vmem:[#allocation5 + $0x360] sm:$0xff]
    %v1055 = vld [vmem:[#allocation5 + $0x368] sm:$0xff]
    %v1056 = vld [vmem:[#allocation5 + $0x370] sm:$0xff]
    %v1057 = vld [vmem:[#allocation5 + $0x378] sm:$0xff]
    %v1058 = vld [vmem:[#allocation5 + $0x380] sm:$0xff]
    %v1059 = vld [vmem:[#allocation5 + $0x388] sm:$0xff]
    %v1060 = vld [vmem:[#allocation5 + $0x390] sm:$0xff]
    %v1061 = vld [vmem:[#allocation5 + $0x398] sm:$0xff]
    %v1062 = vld [vmem:[#allocation5 + $0x3a0] sm:$0xff]
    %v1063 = vld [vmem:[#allocation5 + $0x3a8] sm:$0xff]
    %v1064 = vld [vmem:[#allocation5 + $0x3b0] sm:$0xff]
    %v1065 = vld [vmem:[#allocation5 + $0x3b8] sm:$0xff]
    %v1066 = vld [vmem:[#allocation5 + $0x3c0] sm:$0xff]
    %v1067 = vld [vmem:[#allocation5 + $0x3c8] sm:$0xff]
    %v1068 = vld [vmem:[#allocation5 + $0x3d0] sm:$0xff]
    %v1069 = vld [vmem:[#allocation5 + $0x3d8] sm:$0xff]
    %v1070 = vld [vmem:[#allocation5 + $0x3e0] sm:$0xff]
    %v1071 = vld [vmem:[#allocation5 + $0x3e8] sm:$0xff]
    %v1072 = vld [vmem:[#allocation5 + $0x3f0] sm:$0xff]
    %v1073 = vld [vmem:[#allocation5 + $0x3f8] sm:$0xff]
    %v1074 = vld [vmem:[%s6] sm:$0x3]
    %1075 = vset.pattern.permute.xlu0 33
    %1076 = vperm.xlu0 %1075, %v110
    %v1077 = vpop.permute.xlu0 %1076
    %1079 = vset.pattern.permute.xlu0 33
    %1080 = vperm.xlu0 %1079, %v111
    %v1081 = vpop.permute.xlu0 %1080
    %v1084 = vlaneseq
    %v1085 = vshrl.u32 %v1084, 7
    %v1086 = vsub.s32 0, %v1085
    %v1087 = vrot.slane %v1074, %v1086
    %v1088 = vlaneseq
    %v1089 = vshrl.u32 %v1088, 7
    %v1090 = vsub.s32 1, %v1089
    %v1091 = vrot.slane %v1074, %v1090
    %v1094 = vmul.f32 %v1077, %v1087
    %v1095 = vmul.f32 %v1077, %v1091
    %v1096 = vmul.f32 %v1081, %v1087
    %v1097 = vmul.f32 %v1081, %v1091
    %1098 = vmatprep.subr.mxu0 %v947
    %1099 = vmatpush1.msra.mxu0 %v946
    %1100 = vmatprep.subr.mxu0 %v949
    %1101 = vmatpush1.msra.mxu0 %v948
    %1102 = vmatprep.subr.mxu0 %v951
    %1103 = vmatpush1.msra.mxu0 %v950
    %1104 = vmatprep.subr.mxu0 %v953
    %1105 = vmatpush1.msra.mxu0 %v952
    %1106 = vmatprep.subr.mxu0 %v955
    %1107 = vmatpush1.msra.mxu0 %v954
    %1108 = vmatprep.subr.mxu0 %v957
    %1109 = vmatpush1.msra.mxu0 %v956
    %1110 = vmatprep.subr.mxu0 %v959
    %1111 = vmatpush1.msra.mxu0 %v958
    %1112 = vmatprep.subr.mxu0 %v961
    %1113 = vmatpush1.msra.mxu0 %v960
    %1114 = vmatprep.subr.mxu0 %v963
    %1115 = vmatpush1.msra.mxu0 %v962
    %1116 = vmatprep.subr.mxu0 %v965
    %1117 = vmatpush1.msra.mxu0 %v964
    %1118 = vmatprep.subr.mxu0 %v967
    %1119 = vmatpush1.msra.mxu0 %v966
    %1120 = vmatprep.subr.mxu0 %v969
    %1121 = vmatpush1.msra.mxu0 %v968
    %1122 = vmatprep.subr.mxu0 %v971
    %1123 = vmatpush1.msra.mxu0 %v970
    %1124 = vmatprep.subr.mxu0 %v973
    %1125 = vmatpush1.msra.mxu0 %v972
    %1126 = vmatprep.subr.mxu0 %v975
    %1127 = vmatpush1.msra.mxu0 %v974
    %1128 = vmatprep.subr.mxu0 %v977
    %1129 = vmatpush1.msra.mxu0 %v976
    %1130 = vmatprep.subr.mxu0 %v979
    %1131 = vmatpush1.msra.mxu0 %v978
    %1132 = vmatprep.subr.mxu0 %v981
    %1133 = vmatpush1.msra.mxu0 %v980
    %1134 = vmatprep.subr.mxu0 %v983
    %1135 = vmatpush1.msra.mxu0 %v982
    %1136 = vmatprep.subr.mxu0 %v985
    %1137 = vmatpush1.msra.mxu0 %v984
    %1138 = vmatprep.subr.mxu0 %v987
    %1139 = vmatpush1.msra.mxu0 %v986
    %1140 = vmatprep.subr.mxu0 %v989
    %1141 = vmatpush1.msra.mxu0 %v988
    %1142 = vmatprep.subr.mxu0 %v991
    %1143 = vmatpush1.msra.mxu0 %v990
    %1144 = vmatprep.subr.mxu0 %v993
    %1145 = vmatpush1.msra.mxu0 %v992
    %1146 = vmatprep.subr.mxu0 %v995
    %1147 = vmatpush1.msra.mxu0 %v994
    %1148 = vmatprep.subr.mxu0 %v997
    %1149 = vmatpush1.msra.mxu0 %v996
    %1150 = vmatprep.subr.mxu0 %v999
    %1151 = vmatpush1.msra.mxu0 %v998
    %1152 = vmatprep.subr.mxu0 %v1001
    %1153 = vmatpush1.msra.mxu0 %v1000
    %1154 = vmatprep.subr.mxu0 %v1003
    %1155 = vmatpush1.msra.mxu0 %v1002
    %1156 = vmatprep.subr.mxu0 %v1005
    %1157 = vmatpush1.msra.mxu0 %v1004
    %1158 = vmatprep.subr.mxu0 %v1007
    %1159 = vmatpush1.msra.mxu0 %v1006
    %1160 = vmatprep.subr.mxu0 %v1009
    %1161 = vmatpush1.msra.mxu0 %v1008
    %1162 = vmatprep.mubr.f32.mxu0 %v939
    %1163 = vmatmul.mubr.f32.gmra.mrb[0].mxu0 %v938
    %v1164 = vpop.f32.mrb[0].mxu0
    %v1165 = vadd.f32 %v1094, %v1164
    %v1166 = vpop.f32.mrb[0].mxu0
    %v1167 = vadd.f32 %v1095, %v1166
    %1168 = vmatprep.mubr.f32.mxu0 %v943
    %1169 = vmatmul.mubr.f32.gmra.mrb[0].mxu0 %v942
    %v1170 = vpop.f32.mrb[0].mxu0
    %v1171 = vadd.f32 %v1096, %v1170
    %v1172 = vpop.f32.mrb[0].mxu0
    %v1173 = vadd.f32 %v1097, %v1172
    %1174 = vdwg.mxu0
    %1175 = vmatprep.subr.mxu0 %v1011
    %1176 = vmatpush1.msra.mxu0 %v1010
    %1177 = vmatprep.subr.mxu0 %v1013
    %1178 = vmatpush1.msra.mxu0 %v1012
    %1179 = vmatprep.subr.mxu0 %v1015
    %1180 = vmatpush1.msra.mxu0 %v1014
    %1181 = vmatprep.subr.mxu0 %v1017
    %1182 = vmatpush1.msra.mxu0 %v1016
    %1183 = vmatprep.subr.mxu0 %v1019
    %1184 = vmatpush1.msra.mxu0 %v1018
    %1185 = vmatprep.subr.mxu0 %v1021
    %1186 = vmatpush1.msra.mxu0 %v1020
    %1187 = vmatprep.subr.mxu0 %v1023
    %1188 = vmatpush1.msra.mxu0 %v1022
    %1189 = vmatprep.subr.mxu0 %v1025
    %1190 = vmatpush1.msra.mxu0 %v1024
    %1191 = vmatprep.subr.mxu0 %v1027
    %1192 = vmatpush1.msra.mxu0 %v1026
    %1193 = vmatprep.subr.mxu0 %v1029
    %1194 = vmatpush1.msra.mxu0 %v1028
    %1195 = vmatprep.subr.mxu0 %v1031
    %1196 = vmatpush1.msra.mxu0 %v1030
    %1197 = vmatprep.subr.mxu0 %v1033
    %1198 = vmatpush1.msra.mxu0 %v1032
    %1199 = vmatprep.subr.mxu0 %v1035
    %1200 = vmatpush1.msra.mxu0 %v1034
    %1201 = vmatprep.subr.mxu0 %v1037
    %1202 = vmatpush1.msra.mxu0 %v1036
    %1203 = vmatprep.subr.mxu0 %v1039
    %1204 = vmatpush1.msra.mxu0 %v1038
    %1205 = vmatprep.subr.mxu0 %v1041
    %1206 = vmatpush1.msra.mxu0 %v1040
    %1207 = vmatprep.subr.mxu0 %v1043
    %1208 = vmatpush1.msra.mxu0 %v1042
    %1209 = vmatprep.subr.mxu0 %v1045
    %1210 = vmatpush1.msra.mxu0 %v1044
    %1211 = vmatprep.subr.mxu0 %v1047
    %1212 = vmatpush1.msra.mxu0 %v1046
    %1213 = vmatprep.subr.mxu0 %v1049
    %1214 = vmatpush1.msra.mxu0 %v1048
    %1215 = vmatprep.subr.mxu0 %v1051
    %1216 = vmatpush1.msra.mxu0 %v1050
    %1217 = vmatprep.subr.mxu0 %v1053
    %1218 = vmatpush1.msra.mxu0 %v1052
    %1219 = vmatprep.subr.mxu0 %v1055
    %1220 = vmatpush1.msra.mxu0 %v1054
    %1221 = vmatprep.subr.mxu0 %v1057
    %1222 = vmatpush1.msra.mxu0 %v1056
    %1223 = vmatprep.subr.mxu0 %v1059
    %1224 = vmatpush1.msra.mxu0 %v1058
    %1225 = vmatprep.subr.mxu0 %v1061
    %1226 = vmatpush1.msra.mxu0 %v1060
    %1227 = vmatprep.subr.mxu0 %v1063
    %1228 = vmatpush1.msra.mxu0 %v1062
    %1229 = vmatprep.subr.mxu0 %v1065
    %1230 = vmatpush1.msra.mxu0 %v1064
    %1231 = vmatprep.subr.mxu0 %v1067
    %1232 = vmatpush1.msra.mxu0 %v1066
    %1233 = vmatprep.subr.mxu0 %v1069
    %1234 = vmatpush1.msra.mxu0 %v1068
    %1235 = vmatprep.subr.mxu0 %v1071
    %1236 = vmatpush1.msra.mxu0 %v1070
    %1237 = vmatprep.subr.mxu0 %v1073
    %1238 = vmatpush1.msra.mxu0 %v1072
    %1239 = vmatprep.mubr.f32.mxu0 %v941
    %1240 = vmatmul.mubr.f32.gmra.mrb[0].mxu0 %v940
    %v1241 = vpop.f32.mrb[0].mxu0
    %v1242 = vadd.f32 %v1165, %v1241
    %v1243 = vpop.f32.mrb[0].mxu0
    %v1244 = vadd.f32 %v1167, %v1243
    %1245 = vmatprep.mubr.f32.mxu0 %v945
    %1246 = vmatmul.mubr.f32.gmra.mrb[0].mxu0 %v944
    %v1247 = vpop.f32.mrb[0].mxu0
    %v1248 = vadd.f32 %v1171, %v1247
    %v1249 = vpop.f32.mrb[0].mxu0
    %v1250 = vadd.f32 %v1173, %v1249
    %1251 = vdwg.mxu0
    %v1252 = vld [vmem:[%s7] sm:$0x3]
    %1253 = vset.pattern.permute.xlu0 34
    %1254 = vperm.xlu0 %1253, %v110
    %v1255 = vpop.permute.xlu0 %1254
    %1257 = vset.pattern.permute.xlu0 34
    %1258 = vperm.xlu0 %1257, %v111
    %v1259 = vpop.permute.xlu0 %1258
    %v1262 = vlaneseq
    %v1263 = vshrl.u32 %v1262, 7
    %v1264 = vsub.s32 0, %v1263
    %v1265 = vrot.slane %v1252, %v1264
    %v1266 = vlaneseq
    %v1267 = vshrl.u32 %v1266, 7
    %v1268 = vsub.s32 1, %v1267
    %v1269 = vrot.slane %v1252, %v1268
    %v1272 = vmul.f32 %v1255, %v1265
    %v1273 = vmul.f32 %v1255, %v1269
    %v1274 = vmul.f32 %v1259, %v1265
    %v1275 = vmul.f32 %v1259, %v1269
    %v1276 = vadd.f32 %v1242, %v1272
    %v1277 = vadd.f32 %v1244, %v1273
    %v1278 = vadd.f32 %v1248, %v1274
    %v1279 = vadd.f32 %v1250, %v1275
    %v1280 = vld [vmem:[%s8] sm:$0x3]
    %v1282 = vlaneseq
    %v1283 = vshrl.u32 %v1282, 7
    %v1284 = vsub.s32 0, %v1283
    %v1285 = vrot.slane %v1280, %v1284
    %v1286 = vlaneseq
    %v1287 = vshrl.u32 %v1286, 7
    %v1288 = vsub.s32 1, %v1287
    %v1289 = vrot.slane %v1280, %v1288
    %v1292 = vadd.f32 %v1276, %v1285
    %v1293 = vadd.f32 %v1277, %v1289
    %v1294 = vadd.f32 %v1278, %v1285
    %v1295 = vadd.f32 %v1279, %v1289
    %v1296 = vmul.f32 %v1292, 0.2
    %v1297 = vmul.f32 %v1293, 0.2
    %v1298 = vmul.f32 %v1294, 0.2
    %v1299 = vmul.f32 %v1295, 0.2
    %v1300 = vmax.f32 %v1292, %v1296
    %v1301 = vmax.f32 %v1293, %v1297
    %v1302 = vmax.f32 %v1294, %v1298
    %v1303 = vmax.f32 %v1295, %v1299
    %v1304 = vld [vmem:[#allocation7] sm:$0xff]
    %v1305 = vld [vmem:[#allocation7 + $0x8] sm:$0xff]
    %v1306 = vld [vmem:[#allocation7 + $0x10] sm:$0xff]
    %v1307 = vld [vmem:[#allocation7 + $0x18] sm:$0xff]
    %v1308 = vld [vmem:[#allocation7 + $0x20] sm:$0xff]
    %v1309 = vld [vmem:[#allocation7 + $0x28] sm:$0xff]
    %v1310 = vld [vmem:[#allocation7 + $0x30] sm:$0xff]
    %v1311 = vld [vmem:[#allocation7 + $0x38] sm:$0xff]
    %v1312 = vld [vmem:[#allocation7 + $0x40] sm:$0xff]
    %v1313 = vld [vmem:[#allocation7 + $0x48] sm:$0xff]
    %v1314 = vld [vmem:[#allocation7 + $0x50] sm:$0xff]
    %v1315 = vld [vmem:[#allocation7 + $0x58] sm:$0xff]
    %v1316 = vld [vmem:[#allocation7 + $0x60] sm:$0xff]
    %v1317 = vld [vmem:[#allocation7 + $0x68] sm:$0xff]
    %v1318 = vld [vmem:[#allocation7 + $0x70] sm:$0xff]
    %v1319 = vld [vmem:[#allocation7 + $0x78] sm:$0xff]
    %v1320 = vld [vmem:[#allocation7 + $0x80] sm:$0xff]
    %v1321 = vld [vmem:[#allocation7 + $0x88] sm:$0xff]
    %v1322 = vld [vmem:[#allocation7 + $0x90] sm:$0xff]
    %v1323 = vld [vmem:[#allocation7 + $0x98] sm:$0xff]
    %v1324 = vld [vmem:[#allocation7 + $0xa0] sm:$0xff]
    %v1325 = vld [vmem:[#allocation7 + $0xa8] sm:$0xff]
    %v1326 = vld [vmem:[#allocation7 + $0xb0] sm:$0xff]
    %v1327 = vld [vmem:[#allocation7 + $0xb8] sm:$0xff]
    %v1328 = vld [vmem:[#allocation7 + $0xc0] sm:$0xff]
    %v1329 = vld [vmem:[#allocation7 + $0xc8] sm:$0xff]
    %v1330 = vld [vmem:[#allocation7 + $0xd0] sm:$0xff]
    %v1331 = vld [vmem:[#allocation7 + $0xd8] sm:$0xff]
    %v1332 = vld [vmem:[#allocation7 + $0xe0] sm:$0xff]
    %v1333 = vld [vmem:[#allocation7 + $0xe8] sm:$0xff]
    %v1334 = vld [vmem:[#allocation7 + $0xf0] sm:$0xff]
    %v1335 = vld [vmem:[#allocation7 + $0xf8] sm:$0xff]
    %v1336 = vld [vmem:[#allocation8] sm:$0x1]
    %v1338 = vlaneseq
    %v1339 = vshrl.u32 %v1338, 7
    %v1340 = vsub.s32 0, %v1339
    %v1341 = vrot.slane %v1336, %v1340
    %1343 = vmatprep.subr.mxu0 0.0
    %1344 = vmatpush1.msra.mxu0 %v1304
    %1345 = vmatprep.subr.mxu0 0.0
    %1346 = vmatpush1.msra.mxu0 %v1305
    %1347 = vmatprep.subr.mxu0 0.0
    %1348 = vmatpush1.msra.mxu0 %v1306
    %1349 = vmatprep.subr.mxu0 0.0
    %1350 = vmatpush1.msra.mxu0 %v1307
    %1351 = vmatprep.subr.mxu0 0.0
    %1352 = vmatpush1.msra.mxu0 %v1308
    %1353 = vmatprep.subr.mxu0 0.0
    %1354 = vmatpush1.msra.mxu0 %v1309
    %1355 = vmatprep.subr.mxu0 0.0
    %1356 = vmatpush1.msra.mxu0 %v1310
    %1357 = vmatprep.subr.mxu0 0.0
    %1358 = vmatpush1.msra.mxu0 %v1311
    %1359 = vmatprep.subr.mxu0 0.0
    %1360 = vmatpush1.msra.mxu0 %v1312
    %1361 = vmatprep.subr.mxu0 0.0
    %1362 = vmatpush1.msra.mxu0 %v1313
    %1363 = vmatprep.subr.mxu0 0.0
    %1364 = vmatpush1.msra.mxu0 %v1314
    %1365 = vmatprep.subr.mxu0 0.0
    %1366 = vmatpush1.msra.mxu0 %v1315
    %1367 = vmatprep.subr.mxu0 0.0
    %1368 = vmatpush1.msra.mxu0 %v1316
    %1369 = vmatprep.subr.mxu0 0.0
    %1370 = vmatpush1.msra.mxu0 %v1317
    %1371 = vmatprep.subr.mxu0 0.0
    %1372 = vmatpush1.msra.mxu0 %v1318
    %1373 = vmatprep.subr.mxu0 0.0
    %1374 = vmatpush1.msra.mxu0 %v1319
    %1375 = vmatprep.subr.mxu0 0.0
    %1376 = vmatpush1.msra.mxu0 %v1320
    %1377 = vmatprep.subr.mxu0 0.0
    %1378 = vmatpush1.msra.mxu0 %v1321
    %1379 = vmatprep.subr.mxu0 0.0
    %1380 = vmatpush1.msra.mxu0 %v1322
    %1381 = vmatprep.subr.mxu0 0.0
    %1382 = vmatpush1.msra.mxu0 %v1323
    %1383 = vmatprep.subr.mxu0 0.0
    %1384 = vmatpush1.msra.mxu0 %v1324
    %1385 = vmatprep.subr.mxu0 0.0
    %1386 = vmatpush1.msra.mxu0 %v1325
    %1387 = vmatprep.subr.mxu0 0.0
    %1388 = vmatpush1.msra.mxu0 %v1326
    %1389 = vmatprep.subr.mxu0 0.0
    %1390 = vmatpush1.msra.mxu0 %v1327
    %1391 = vmatprep.subr.mxu0 0.0
    %1392 = vmatpush1.msra.mxu0 %v1328
    %1393 = vmatprep.subr.mxu0 0.0
    %1394 = vmatpush1.msra.mxu0 %v1329
    %1395 = vmatprep.subr.mxu0 0.0
    %1396 = vmatpush1.msra.mxu0 %v1330
    %1397 = vmatprep.subr.mxu0 0.0
    %1398 = vmatpush1.msra.mxu0 %v1331
    %1399 = vmatprep.subr.mxu0 0.0
    %1400 = vmatpush1.msra.mxu0 %v1332
    %1401 = vmatprep.subr.mxu0 0.0
    %1402 = vmatpush1.msra.mxu0 %v1333
    %1403 = vmatprep.subr.mxu0 0.0
    %1404 = vmatpush1.msra.mxu0 %v1334
    %1405 = vmatprep.subr.mxu0 0.0
    %1406 = vmatpush1.msra.mxu0 %v1335
    %1407 = vmatprep.mubr.f32.mxu0 %v1301
    %1408 = vmatmul.mubr.f32.gmra.mrb[0].mxu0 %v1300
    %v1409 = vpop.f32.mrb[0].mxu0
    %v1410 = vadd.f32 %v1341, %v1409
    %v1411 = vpop.f32.mrb[0].mxu0
    %1412 = vmatprep.mubr.f32.mxu0 %v1303
    %1413 = vmatmul.mubr.f32.gmra.mrb[0].mxu0 %v1302
    %v1414 = vpop.f32.mrb[0].mxu0
    %v1415 = vadd.f32 %v1341, %v1414
    %v1416 = vpop.f32.mrb[0].mxu0
    %1417 = vdwg.mxu0
    %v1418 = vmul.f32 %v1410, 0.2
    %v1419 = vmul.f32 %v1415, 0.2
    %v1420 = vmax.f32 %v1410, %v1418
    %v1421 = vmax.f32 %v1415, %v1419
    %v1422 = vld [vmem:[#allocation10] sm:$0x1]
    %v1423 = vld [vmem:[#allocation2] sm:$0x1]
    %1425 = vset.pattern.permute.xlu0 0
    %1426 = vperm.xlu0 %1425, %v1423
    %v1427 = vpop.permute.xlu0 %1426
    %v1429 = vlaneseq
    %v1430 = vshrl.u32 %v1429, 7
    %v1431 = vsub.s32 0, %v1430
    %v1432 = vrot.slane %v1427, %v1431
    %1433 = vmatprep.subr.mxu0 0.0
    %1434 = vmatpush1.xpose.msra.mxu0 %v1420
    %1435 = vmatprep.subr.mxu0 0.0
    %1436 = vmatpush1.xpose.msra.mxu0 %v1421
    %1437 = vmatprep.subr.mxu0 0.0
    %1438 = vmatpush1.xpose.msra.mxu0 0.0
    %1439 = vmatprep.subr.mxu0 0.0
    %1440 = vmatpush1.xpose.msra.mxu0 0.0
    %1441 = vmatprep.subr.mxu0 0.0
    %1442 = vmatpush1.xpose.msra.mxu0 0.0
    %1443 = vmatprep.subr.mxu0 0.0
    %1444 = vmatpush1.xpose.msra.mxu0 0.0
    %1445 = vmatprep.subr.mxu0 0.0
    %1446 = vmatpush1.xpose.msra.mxu0 0.0
    %1447 = vmatprep.subr.mxu0 0.0
    %1448 = vmatpush1.xpose.msra.mxu0 0.0
    %1449 = vmatprep.subr.mxu0 0.0
    %1450 = vmatpush1.xpose.msra.mxu0 0.0
    %1451 = vmatprep.subr.mxu0 0.0
    %1452 = vmatpush1.xpose.msra.mxu0 0.0
    %1453 = vmatprep.subr.mxu0 0.0
    %1454 = vmatpush1.xpose.msra.mxu0 0.0
    %1455 = vmatprep.subr.mxu0 0.0
    %1456 = vmatpush1.xpose.msra.mxu0 0.0
    %1457 = vmatprep.subr.mxu0 0.0
    %1458 = vmatpush1.xpose.msra.mxu0 0.0
    %1459 = vmatprep.subr.mxu0 0.0
    %1460 = vmatpush1.xpose.msra.mxu0 0.0
    %1461 = vmatprep.subr.mxu0 0.0
    %1462 = vmatpush1.xpose.msra.mxu0 0.0
    %1463 = vmatprep.subr.mxu0 0.0
    %1464 = vmatpush1.xpose.msra.mxu0 0.0
    %1465 = vmatprep.subr.mxu0 0.0
    %1466 = vmatpush1.xpose.msra.mxu0 0.0
    %1467 = vmatprep.subr.mxu0 0.0
    %1468 = vmatpush1.xpose.msra.mxu0 0.0
    %1469 = vmatprep.subr.mxu0 0.0
    %1470 = vmatpush1.xpose.msra.mxu0 0.0
    %1471 = vmatprep.subr.mxu0 0.0
    %1472 = vmatpush1.xpose.msra.mxu0 0.0
    %1473 = vmatprep.subr.mxu0 0.0
    %1474 = vmatpush1.xpose.msra.mxu0 0.0
    %1475 = vmatprep.subr.mxu0 0.0
    %1476 = vmatpush1.xpose.msra.mxu0 0.0
    %1477 = vmatprep.subr.mxu0 0.0
    %1478 = vmatpush1.xpose.msra.mxu0 0.0
    %1479 = vmatprep.subr.mxu0 0.0
    %1480 = vmatpush1.xpose.msra.mxu0 0.0
    %1481 = vmatprep.subr.mxu0 0.0
    %1482 = vmatpush1.xpose.msra.mxu0 0.0
    %1483 = vmatprep.subr.mxu0 0.0
    %1484 = vmatpush1.xpose.msra.mxu0 0.0
    %1485 = vmatprep.subr.mxu0 0.0
    %1486 = vmatpush1.xpose.msra.mxu0 0.0
    %1487 = vmatprep.subr.mxu0 0.0
    %1488 = vmatpush1.xpose.msra.mxu0 0.0
    %1489 = vmatprep.subr.mxu0 0.0
    %1490 = vmatpush1.xpose.msra.mxu0 0.0
    %1491 = vmatprep.subr.mxu0 0.0
    %1492 = vmatpush1.xpose.msra.mxu0 0.0
    %1493 = vmatprep.subr.mxu0 0.0
    %1494 = vmatpush1.xpose.msra.mxu0 0.0
    %1495 = vmatprep.subr.mxu0 0.0
    %1496 = vmatpush1.xpose.msra.mxu0 0.0
    %1497 = vmatprep.mubr.f32.mxu0 0.0
    %1498 = vmatmul.mubr.f32.gmra.mrb[0].mxu0 %v1422
    %v1499 = vpop.f32.mrb[0].mxu0
    %v1500 = vadd.f32 %v1432, %v1499
    %v1501 = vpop.f32.mrb[0].mxu0
    %1502 = vdwg.mxu0
    %vm1503 = vcmask 122880
    %1504 = vst.msk [vmem:[%s13] sm:$0x1] %vm1503, %v1500
    // Predicated region
    $region74: #{discriminator_forward.1} parent=1 // pred_check
      _
    $region75: #{discriminator_forward.1} parent=1 // pred_check_branch
      %1506 = sbr.rel (0) target = $region77
    $region76: #{discriminator_forward.1} parent=1 // pred_region
      _
    $region77: #{discriminator_forward.1} parent=1 // pred_fallthru
      _
    // Predicated region
    $region78: #{discriminator_forward.1} parent=1 // pred_check
      _
    $region79: #{discriminator_forward.1} parent=1 // pred_check_branch
      %1508 = sbr.rel (0) target = $region81
    $region80: #{discriminator_forward.1} parent=1 // pred_region
      _
    $region81: #{discriminator_forward.1} parent=1 // pred_fallthru
      _
    %1509 = vsyncpa [#allocation4], 1
    %1510 = vsyncpa [#allocation6], 1
    %1511 = vsyncpa [#allocation9], 1

</llo_original>
